<compile_context>
chip_gen: v6e
topology: v6e:2x2x1
jax: 0.10.0
libtpu: 0.0.40
codegen_flags: <defaults>
</compile_context>

<pallas_src>
import functools

import jax
import jax.numpy as jnp
import numpy as np
from jax.experimental import pallas as pl
from jax.experimental.pallas import tpu as pltpu


def _round_up(x, m):
    return (x + m - 1) // m * m


def _vmem_capacity_bytes():
    try:
        return int(pltpu.get_tpu_info().vmem_capacity_bytes)
    except Exception:
        return 64 * 1024 * 1024  # conservative fallback: smallest (v7x) VMEM


def _make_kernel(*, K, Wp, CB, HB, GT, Cin_tot_pad, Cout_pad, activation):
    """Pallas kernel closed over static config.

    Block shapes seen by the kernel:
      cur_ref : (1, Cin_tot_pad, CB)            mm dtype  (column block of xh)
      nxt_ref : (1, Cin_tot_pad, HB)            mm dtype  (halo from next block)
      w_ref   : (4*Cout_pad, K*K*Cin_tot_pad)   mm dtype
      b_ref   : (4*Cout_pad, 1)                 f32
      wci/wcf/wco : (Cout_pad, CB)              f32
      cprev_ref   : (1, Cout_pad, CB)           f32
      h_ref/c_ref : (1, Cout_pad, CB)
      win_ref : (Cin_tot_pad, CB + HB)          mm scratch (halo'd window)
      pat_ref : (K*K*Cin_tot_pad, CB)           mm scratch (in-kernel im2col)
    """
    act = jnp.tanh if activation == "tanh" else jax.nn.relu
    taps = [ky * Wp + kx for ky in range(K) for kx in range(K)]
    Cp = Cin_tot_pad
    Co = Cout_pad

    def _sigmoid(x):
        # sigmoid(x) == 0.5 * tanh(0.5 * x) + 0.5  -> one EUP op per element.
        return 0.5 * jnp.tanh(0.5 * x) + 0.5

    def kernel(cur_ref, nxt_ref, w_ref, b_ref, wci_ref, wcf_ref, wco_ref,
               cprev_ref, h_ref, c_ref, win_ref, pat_ref):
        # ---- assemble the halo'd window in VMEM (column block + HB halo) ----
        win_ref[:, :CB] = cur_ref[0]
        win_ref[:, CB:] = nxt_ref[0]

        # ---- in-kernel im2col: K*K statically-shifted copies -> patch tile --
        for t, off in enumerate(taps):          # static python loop (K*K taps)
            pat_ref[t * Cp:(t + 1) * Cp, :] = win_ref[:, off:off + CB]

        bias = b_ref[...]                       # (4*Co, 1) f32

        # ---- conv matmul + gate math in <=512-lane chunks -------------------
        for c0 in range(0, CB, GT):             # static python loop
            conv = jnp.dot(w_ref[...], pat_ref[:, c0:c0 + GT],
                           preferred_element_type=jnp.float32) + bias
            # torch.chunk order along channels: i, f, C(g), o
            i_c = conv[0 * Co:1 * Co]
            f_c = conv[1 * Co:2 * Co]
            g_c = conv[2 * Co:3 * Co]
            o_c = conv[3 * Co:4 * Co]

            c_prev = cprev_ref[0, :, c0:c0 + GT]          # (Co, GT) f32
            ig = _sigmoid(i_c + wci_ref[:, c0:c0 + GT] * c_prev)
            fg = _sigmoid(f_c + wcf_ref[:, c0:c0 + GT] * c_prev)
            c_new = fg * c_prev + ig * act(g_c)
            og = _sigmoid(o_c + wco_ref[:, c0:c0 + GT] * c_new)
            h_new = og * act(c_new)

            h_ref[0, :, c0:c0 + GT] = h_new.astype(h_ref.dtype)
            c_ref[0, :, c0:c0 + GT] = c_new.astype(c_ref.dtype)

    return kernel


@functools.partial(
    jax.jit,
    static_argnames=("kernel_size", "padding", "activation", "matmul_dtype",
                     "h_dtype"))
def conv_lstm_cell(X, H_prev, C_prev, conv_w, conv_b, W_ci, W_cf, W_co, *,
                   kernel_size=3, padding=1, activation="tanh",
                   matmul_dtype="bfloat16", h_dtype="float32"):
    """ConvLSTMCell forward (PyTorch conventions, NCHW).

    X: (B, Cin, H, W); H_prev/C_prev: (B, Cout, H, W);
    conv_w: (4*Cout, Cin+Cout, K, K); conv_b: (4*Cout,);
    W_ci/W_cf/W_co: (Cout, H, W).  Returns (H, C) in NCHW.
    """
    B, Cin, H, W = X.shape
    Cout = H_prev.shape[1]
    K = kernel_size
    p = padding
    if 2 * p != K - 1:
        # The module multiplies W_ci (frame_size) with the conv output, so the
        # conv must be 'same'; anything else is ill-defined in PyTorch too.
        raise ValueError("ConvLSTMCell requires 2*padding == kernel_size - 1")

    Cin_tot = Cin + Cout
    Cin_tot_pad = _round_up(Cin_tot, 8)     # sublane-aligned contraction rows
    Cout_pad = _round_up(Cout, 8)           # sublane-aligned gate row slices
    Cout4 = 4 * Cout_pad
    KDp = K * K * Cin_tot_pad

    Hp, Wp = H + 2 * p, W + 2 * p
    halo = (K - 1) * Wp + (K - 1)           # max static tap offset (flat cols)
    HB = _round_up(max(halo, 1), 128)       # halo block width (lane aligned)
    needed_out = H * Wp                     # all valid outputs live in [0, H*Wp)

    mm_dtype = jnp.dtype(matmul_dtype)
    out_h_dtype = jnp.dtype(h_dtype)
    mm_bytes = mm_dtype.itemsize
    h_bytes = out_h_dtype.itemsize

    # ---- VMEM-budgeted column block (generation aware) ----------------------
    vmem_cap = _vmem_capacity_bytes()
    budget = vmem_cap // 3                  # headroom for compiler temporaries

    def est_vmem(cb):
        gt = min(cb, 512)
        b = 2 * Cin_tot_pad * cb * mm_bytes        # cur (double buffered)
        b += 2 * Cin_tot_pad * HB * mm_bytes       # halo block
        b += 2 * Cout4 * KDp * mm_bytes            # conv weights
        b += 2 * Cout4 * 4                         # bias
        b += 2 * 3 * Cout_pad * cb * 4             # peephole weights
        b += 2 * Cout_pad * cb * 4                 # c_prev
        b += 2 * Cout_pad * cb * h_bytes           # h out
        b += 2 * Cout_pad * cb * 4                 # c out
        b += Cin_tot_pad * (cb + HB) * mm_bytes    # window scratch
        b += KDp * cb * mm_bytes                   # patch scratch
        b += 8 * Cout4 * gt * 4                    # gate-math temporaries
        return b

    MAX_CB = 8192
    CB = max(HB, min(_round_up(needed_out, HB), _round_up(MAX_CB, HB)))
    while CB > HB and est_vmem(CB) > budget:
        CB -= HB
    n_cb = -(-needed_out // CB)
    # Guarantee >= 2 grid steps so a v7x megacore can split the work.
    if B * n_cb < 2 and CB > HB:
        CB = max(HB, (CB // 2) // HB * HB)
        n_cb = -(-needed_out // CB)

    OUT_COLS = n_cb * CB
    IN_COLS = OUT_COLS + HB
    GT = CB if CB <= 512 else (512 if CB % 512 == 0 else
                               (256 if CB % 256 == 0 else 128))

    vmem_limit = int(min(vmem_cap * 3 // 4,
                         max(32 * 1024 * 1024,
                             est_vmem(CB) + 8 * 1024 * 1024)))

    # ---- inputs: cast early, pad + flatten only (no im2col, no transposes) --
    xh = jnp.concatenate([X, H_prev], axis=1).astype(mm_dtype)
    xh = jnp.pad(xh, ((0, 0), (0, Cin_tot_pad - Cin_tot), (p, p), (p, p)))
    xh_flat = xh.reshape(B, Cin_tot_pad, Hp * Wp)
    xh_flat = jnp.pad(xh_flat, ((0, 0), (0, 0), (0, IN_COLS - Hp * Wp)))

    # Conv weight (4*Cout, Cin_tot, K, K) -> (4*Cout_pad, K*K*Cin_tot_pad),
    # column order (tap-major, channel-minor) matching the in-kernel patch tile.
    w_g = conv_w.reshape(4, Cout, Cin_tot, K, K)
    w_g = jnp.transpose(w_g, (0, 1, 3, 4, 2)).reshape(4, Cout, K * K, Cin_tot)
    w_full = jnp.zeros((4, Cout_pad, K * K, Cin_tot_pad), conv_w.dtype)
    w_full = w_full.at[:, :Cout, :, :Cin_tot].set(w_g)
    w2 = w_full.reshape(Cout4, KDp).astype(mm_dtype)

    b_full = jnp.zeros((4, Cout_pad), jnp.float32)
    b_full = b_full.at[:, :Cout].set(conv_b.reshape(4, Cout).astype(jnp.float32))
    b2 = b_full.reshape(Cout4, 1)

    def to_cols(a, has_batch):
        """(..., Cout, H, W) -> (..., Cout_pad, OUT_COLS) on the padded-row
        (W -> Wp) flat layout used for the conv output columns."""
        a = a.astype(jnp.float32)
        lead = ((0, 0),) if has_batch else ()
        a = jnp.pad(a, lead + ((0, Cout_pad - Cout), (0, 0), (0, Wp - W)))
        a = a.reshape(a.shape[:-2] + (H * Wp,))
        return jnp.pad(a, lead + ((0, 0), (0, OUT_COLS - H * Wp)))

    wci = to_cols(W_ci, has_batch=False)
    wcf = to_cols(W_cf, has_batch=False)
    wco = to_cols(W_co, has_batch=False)
    c_prev = to_cols(C_prev, has_batch=True)

    kernel = _make_kernel(K=K, Wp=Wp, CB=CB, HB=HB, GT=GT,
                          Cin_tot_pad=Cin_tot_pad, Cout_pad=Cout_pad,
                          activation=activation)

    cb_over_hb = CB // HB
    h_flat, c_flat = pl.pallas_call(
        kernel,
        grid=(n_cb, B),          # batch innermost: peephole blocks stay resident
        in_specs=[
            pl.BlockSpec((1, Cin_tot_pad, CB), lambda j, b: (b, 0, j)),
            pl.BlockSpec((1, Cin_tot_pad, HB),
                         lambda j, b: (b, 0, (j + 1) * cb_over_hb)),
            pl.BlockSpec((Cout4, KDp), lambda j, b: (0, 0)),
            pl.BlockSpec((Cout4, 1), lambda j, b: (0, 0)),
            pl.BlockSpec((Cout_pad, CB), lambda j, b: (0, j)),
            pl.BlockSpec((Cout_pad, CB), lambda j, b: (0, j)),
            pl.BlockSpec((Cout_pad, CB), lambda j, b: (0, j)),
            pl.BlockSpec((1, Cout_pad, CB), lambda j, b: (b, 0, j)),
        ],
        out_specs=(
            pl.BlockSpec((1, Cout_pad, CB), lambda j, b: (b, 0, j)),
            pl.BlockSpec((1, Cout_pad, CB), lambda j, b: (b, 0, j)),
        ),
        out_shape=(
            jax.ShapeDtypeStruct((B, Cout_pad, OUT_COLS), out_h_dtype),
            jax.ShapeDtypeStruct((B, Cout_pad, OUT_COLS), jnp.float32),
        ),
        scratch_shapes=[
            pltpu.VMEM((Cin_tot_pad, CB + HB), mm_dtype),   # halo'd window
            pltpu.VMEM((KDp, CB), mm_dtype),                # im2col patch tile
        ],
        input_output_aliases={7: 1},     # reuse c_prev's HBM buffer for C
        compiler_params=pltpu.CompilerParams(
            dimension_semantics=("parallel", "parallel"),
            vmem_limit_bytes=vmem_limit),
    )(xh_flat, xh_flat, w2, b2, wci, wcf, wco, c_prev)

    # Drop wrap/pad columns and padded channels; they never re-enter the
    # recurrence (the next step rebuilds its inputs from these NCHW outputs).
    h = h_flat[:, :Cout, :H * Wp].reshape(B, Cout, H, Wp)[..., :W]
    c = c_flat[:, :Cout, :H * Wp].reshape(B, Cout, H, Wp)[..., :W]
    return h, c


def _reference(X, H_prev, C_prev, conv_w, conv_b, W_ci, W_cf, W_co, padding):
    """Pure-JAX (XLA conv) reference of the PyTorch forward, NCHW, f32."""
    xh = jnp.concatenate([X, H_prev], axis=1)
    conv = jax.lax.conv_general_dilated(
        xh, conv_w, window_strides=(1, 1),
        padding=[(padding, padding), (padding, padding)],
        dimension_numbers=("NCHW", "OIHW", "NCHW"))
    conv = conv + conv_b[None, :, None, None]
    Cout = H_prev.shape[1]
    i_c, f_c, g_c, o_c = (conv[:, k * Cout:(k + 1) * Cout] for k in range(4))
    ig = jax.nn.sigmoid(i_c + W_ci * C_prev)
    fg = jax.nn.sigmoid(f_c + W_cf * C_prev)
    C = fg * C_prev + ig * jnp.tanh(g_c)
    og = jax.nn.sigmoid(o_c + W_co * C)
    return og * jnp.tanh(C), C


if __name__ == "__main__":
    # module config: in_channels=4, out_channels=8, kernel_size=3, padding=1,
    # activation='tanh', frame_size=(16, 16); batch=2
    B, Cin, Cout, Hh, Ww, K, pad = 2, 4, 8, 16, 16, 3, 1

    key = jax.random.PRNGKey(0)
    ks = jax.random.split(key, 8)
    X      = jax.random.normal(ks[0], (B, Cin, Hh, Ww), jnp.float32)
    H_prev = jax.random.normal(ks[1], (B, Cout, Hh, Ww), jnp.float32)
    C_prev = jax.random.normal(ks[2], (B, Cout, Hh, Ww), jnp.float32)
    conv_w = 0.1 * jax.random.normal(ks[3], (4 * Cout, Cin + Cout, K, K), jnp.float32)
    conv_b = 0.1 * jax.random.normal(ks[4], (4 * Cout,), jnp.float32)
    W_ci   = 0.1 * jax.random.normal(ks[5], (Cout, Hh, Ww), jnp.float32)
    W_cf   = 0.1 * jax.random.normal(ks[6], (Cout, Hh, Ww), jnp.float32)
    W_co   = 0.1 * jax.random.normal(ks[7], (Cout, Hh, Ww), jnp.float32)

    H_ref, C_ref = _reference(X, H_prev, C_prev, conv_w, conv_b,
                              W_ci, W_cf, W_co, pad)

    # Exact path: f32 MXU operands -> tight tolerance vs. the XLA reference.
    H_f32, C_f32 = conv_lstm_cell(X, H_prev, C_prev, conv_w, conv_b,
                                  W_ci, W_cf, W_co,
                                  kernel_size=K, padding=pad,
                                  matmul_dtype="float32")
    jax.block_until_ready((H_f32, C_f32))
    np.testing.assert_allclose(np.asarray(H_f32), np.asarray(H_ref),
                               rtol=1e-4, atol=1e-4)
    np.testing.assert_allclose(np.asarray(C_f32), np.asarray(C_ref),
                               rtol=1e-4, atol=1e-4)

    # Fast path: bf16 MXU operands (v6e/v7x native), f32 accumulation.
    H_bf, C_bf = conv_lstm_cell(X, H_prev, C_prev, conv_w, conv_b,
                                W_ci, W_cf, W_co,
                                kernel_size=K, padding=pad,
                                matmul_dtype="bfloat16")
    jax.block_until_ready((H_bf, C_bf))
    np.testing.assert_allclose(np.asarray(H_bf), np.asarray(H_ref),
                               rtol=3e-2, atol=3e-2)
    np.testing.assert_allclose(np.asarray(C_bf), np.asarray(C_ref),
                               rtol=3e-2, atol=3e-2)

    print("KERNEL_OK")
</pallas_src>

<mosaic_0001>
module attributes {stable_mosaic.version = 11 : i64} {
  func.func @kernel(%arg0: i32, %arg1: i32, %arg2: memref<1x16x384xf32, #tpu.memory_space<vmem>>, %arg3: memref<1x16x128xf32, #tpu.memory_space<vmem>>, %arg4: memref<32x144xf32, #tpu.memory_space<vmem>>, %arg5: memref<32x1xf32, #tpu.memory_space<vmem>>, %arg6: memref<8x384xf32, #tpu.memory_space<vmem>>, %arg7: memref<8x384xf32, #tpu.memory_space<vmem>>, %arg8: memref<8x384xf32, #tpu.memory_space<vmem>>, %arg9: memref<1x8x384xf32, #tpu.memory_space<vmem>>, %arg10: memref<1x8x384xf32, #tpu.memory_space<vmem>>, %arg11: memref<1x8x384xf32, #tpu.memory_space<vmem>>, %arg12: memref<16x512xf32, #tpu.memory_space<vmem>>, %arg13: memref<144x384xf32, #tpu.memory_space<vmem>>) attributes {dimension_semantics = [#tpu.dimension_semantics<parallel>, #tpu.dimension_semantics<parallel>], iteration_bounds = array<i64: 1, 2>, scalar_prefetch = 0 : i64, scratch_operands = 2 : i64, tpu.core_type = #tpu.core_type<tc>, window_params = [{transform_indices = @transform_0, window_bounds = array<i64: 1, 16, 384>}, {transform_indices = @transform_1, window_bounds = array<i64: 1, 16, 128>}, {pipeline_mode = #tpu.pipeline_mode<synchronous>, transform_indices = @transform_2, window_bounds = array<i64: 32, 144>}, {pipeline_mode = #tpu.pipeline_mode<synchronous>, transform_indices = @transform_3, window_bounds = array<i64: 32, 1>}, {transform_indices = @transform_4, window_bounds = array<i64: 8, 384>}, {transform_indices = @transform_5, window_bounds = array<i64: 8, 384>}, {transform_indices = @transform_6, window_bounds = array<i64: 8, 384>}, {transform_indices = @transform_7, window_bounds = array<i64: 1, 8, 384>}, {transform_indices = @transform_8, window_bounds = array<i64: 1, 8, 384>}, {transform_indices = @transform_9, window_bounds = array<i64: 1, 8, 384>}]} {
    %c0 = arith.constant 0 : index
    %c0_0 = arith.constant 0 : index
    %c0_1 = arith.constant 0 : index
    %0 = vector.load %arg2[%c0, %c0_0, %c0_1] : memref<1x16x384xf32, #tpu.memory_space<vmem>>, vector<1x16x384xf32>
    %1 = vector.shape_cast %0 : vector<1x16x384xf32> to vector<16x384xf32>
    %c0_2 = arith.constant 0 : index
    %c0_3 = arith.constant 0 : index
    %2 = vector.load %arg12[%c0_2, %c0_3] : memref<16x512xf32, #tpu.memory_space<vmem>>, vector<16x384xf32>
    tpu.vector_store %arg12[%c0_2, %c0_3], %1 {strides = array<i32>} : memref<16x512xf32, #tpu.memory_space<vmem>>, vector<16x384xf32>,
    %c0_4 = arith.constant 0 : index
    %c0_5 = arith.constant 0 : index
    %c0_6 = arith.constant 0 : index
    %3 = vector.load %arg3[%c0_4, %c0_5, %c0_6] : memref<1x16x128xf32, #tpu.memory_space<vmem>>, vector<1x16x128xf32>
    %4 = vector.shape_cast %3 : vector<1x16x128xf32> to vector<16x128xf32>
    %c0_7 = arith.constant 0 : index
    %c384 = arith.constant 384 : index
    %5 = vector.load %arg12[%c0_7, %c384] : memref<16x512xf32, #tpu.memory_space<vmem>>, vector<16x128xf32>
    tpu.vector_store %arg12[%c0_7, %c384], %4 {strides = array<i32>} : memref<16x512xf32, #tpu.memory_space<vmem>>, vector<16x128xf32>,
    %c0_8 = arith.constant 0 : index
    %c0_9 = arith.constant 0 : index
    %6 = vector.load %arg12[%c0_8, %c0_9] : memref<16x512xf32, #tpu.memory_space<vmem>>, vector<16x384xf32>
    %c0_10 = arith.constant 0 : index
    %c0_11 = arith.constant 0 : index
    %7 = vector.load %arg13[%c0_10, %c0_11] : memref<144x384xf32, #tpu.memory_space<vmem>>, vector<16x384xf32>
    tpu.vector_store %arg13[%c0_10, %c0_11], %6 {strides = array<i32>} : memref<144x384xf32, #tpu.memory_space<vmem>>, vector<16x384xf32>,
    %c0_12 = arith.constant 0 : index
    %c1 = arith.constant 1 : index
    %8 = vector.load %arg12[%c0_12, %c1] : memref<16x512xf32, #tpu.memory_space<vmem>>, vector<16x384xf32>
    %c16 = arith.constant 16 : index
    %c0_13 = arith.constant 0 : index
    %9 = vector.load %arg13[%c16, %c0_13] : memref<144x384xf32, #tpu.memory_space<vmem>>, vector<16x384xf32>
    tpu.vector_store %arg13[%c16, %c0_13], %8 {strides = array<i32>} : memref<144x384xf32, #tpu.memory_space<vmem>>, vector<16x384xf32>,
    %c0_14 = arith.constant 0 : index
    %c2 = arith.constant 2 : index
    %10 = vector.load %arg12[%c0_14, %c2] : memref<16x512xf32, #tpu.memory_space<vmem>>, vector<16x384xf32>
    %c32 = arith.constant 32 : index
    %c0_15 = arith.constant 0 : index
    %11 = vector.load %arg13[%c32, %c0_15] : memref<144x384xf32, #tpu.memory_space<vmem>>, vector<16x384xf32>
    tpu.vector_store %arg13[%c32, %c0_15], %10 {strides = array<i32>} : memref<144x384xf32, #tpu.memory_space<vmem>>, vector<16x384xf32>,
    %c0_16 = arith.constant 0 : index
    %c18 = arith.constant 18 : index
    %12 = vector.load %arg12[%c0_16, %c18] : memref<16x512xf32, #tpu.memory_space<vmem>>, vector<16x384xf32>
    %c48 = arith.constant 48 : index
    %c0_17 = arith.constant 0 : index
    %13 = vector.load %arg13[%c48, %c0_17] : memref<144x384xf32, #tpu.memory_space<vmem>>, vector<16x384xf32>
    tpu.vector_store %arg13[%c48, %c0_17], %12 {strides = array<i32>} : memref<144x384xf32, #tpu.memory_space<vmem>>, vector<16x384xf32>,
    %c0_18 = arith.constant 0 : index
    %c19 = arith.constant 19 : index
    %14 = vector.load %arg12[%c0_18, %c19] : memref<16x512xf32, #tpu.memory_space<vmem>>, vector<16x384xf32>
    %c64 = arith.constant 64 : index
    %c0_19 = arith.constant 0 : index
    %15 = vector.load %arg13[%c64, %c0_19] : memref<144x384xf32, #tpu.memory_space<vmem>>, vector<16x384xf32>
    tpu.vector_store %arg13[%c64, %c0_19], %14 {strides = array<i32>} : memref<144x384xf32, #tpu.memory_space<vmem>>, vector<16x384xf32>,
    %c0_20 = arith.constant 0 : index
    %c20 = arith.constant 20 : index
    %16 = vector.load %arg12[%c0_20, %c20] : memref<16x512xf32, #tpu.memory_space<vmem>>, vector<16x384xf32>
    %c80 = arith.constant 80 : index
    %c0_21 = arith.constant 0 : index
    %17 = vector.load %arg13[%c80, %c0_21] : memref<144x384xf32, #tpu.memory_space<vmem>>, vector<16x384xf32>
    tpu.vector_store %arg13[%c80, %c0_21], %16 {strides = array<i32>} : memref<144x384xf32, #tpu.memory_space<vmem>>, vector<16x384xf32>,
    %c0_22 = arith.constant 0 : index
    %c36 = arith.constant 36 : index
    %18 = vector.load %arg12[%c0_22, %c36] : memref<16x512xf32, #tpu.memory_space<vmem>>, vector<16x384xf32>
    %c96 = arith.constant 96 : index
    %c0_23 = arith.constant 0 : index
    %19 = vector.load %arg13[%c96, %c0_23] : memref<144x384xf32, #tpu.memory_space<vmem>>, vector<16x384xf32>
    tpu.vector_store %arg13[%c96, %c0_23], %18 {strides = array<i32>} : memref<144x384xf32, #tpu.memory_space<vmem>>, vector<16x384xf32>,
    %c0_24 = arith.constant 0 : index
    %c37 = arith.constant 37 : index
    %20 = vector.load %arg12[%c0_24, %c37] : memref<16x512xf32, #tpu.memory_space<vmem>>, vector<16x384xf32>
    %c112 = arith.constant 112 : index
    %c0_25 = arith.constant 0 : index
    %21 = vector.load %arg13[%c112, %c0_25] : memref<144x384xf32, #tpu.memory_space<vmem>>, vector<16x384xf32>
    tpu.vector_store %arg13[%c112, %c0_25], %20 {strides = array<i32>} : memref<144x384xf32, #tpu.memory_space<vmem>>, vector<16x384xf32>,
    %c0_26 = arith.constant 0 : index
    %c38 = arith.constant 38 : index
    %22 = vector.load %arg12[%c0_26, %c38] : memref<16x512xf32, #tpu.memory_space<vmem>>, vector<16x384xf32>
    %c128 = arith.constant 128 : index
    %c0_27 = arith.constant 0 : index
    %23 = vector.load %arg13[%c128, %c0_27] : memref<144x384xf32, #tpu.memory_space<vmem>>, vector<16x384xf32>
    tpu.vector_store %arg13[%c128, %c0_27], %22 {strides = array<i32>} : memref<144x384xf32, #tpu.memory_space<vmem>>, vector<16x384xf32>,
    %c0_28 = arith.constant 0 : index
    %c0_29 = arith.constant 0 : index
    %24 = vector.load %arg5[%c0_28, %c0_29] : memref<32x1xf32, #tpu.memory_space<vmem>>, vector<32x1xf32>
    %c0_30 = arith.constant 0 : index
    %c0_31 = arith.constant 0 : index
    %25 = vector.load %arg4[%c0_30, %c0_31] : memref<32x144xf32, #tpu.memory_space<vmem>>, vector<32x144xf32>
    %c0_32 = arith.constant 0 : index
    %c0_33 = arith.constant 0 : index
    %26 = vector.load %arg13[%c0_32, %c0_33] : memref<144x384xf32, #tpu.memory_space<vmem>>, vector<144x384xf32>
    %cst = arith.constant dense<0.000000e+00> : vector<32x384xf32>
    %27 = tpu.matmul %25, %26, %cst {dimension_numbers = #tpu.dot_dimension_numbers<[1], [0], [0], [1], [0, 0, 1, 1], [], []>} : vector<32x144xf32>, vector<144x384xf32>, vector<32x384xf32> -> vector<32x384xf32>
    %28 = vector.broadcast %24 : vector<32x1xf32> to vector<32x384xf32>
    %29 = arith.addf %27, %28 : vector<32x384xf32>
    %30 = vector.extract_strided_slice %29 {offsets = [0, 0], sizes = [8, 384], strides = [1, 1]} : vector<32x384xf32> to vector<8x384xf32>
    %31 = vector.extract_strided_slice %29 {offsets = [8, 0], sizes = [8, 384], strides = [1, 1]} : vector<32x384xf32> to vector<8x384xf32>
    %32 = vector.extract_strided_slice %29 {offsets = [16, 0], sizes = [8, 384], strides = [1, 1]} : vector<32x384xf32> to vector<8x384xf32>
    %33 = vector.extract_strided_slice %29 {offsets = [24, 0], sizes = [8, 384], strides = [1, 1]} : vector<32x384xf32> to vector<8x384xf32>
    %c0_34 = arith.constant 0 : index
    %c0_35 = arith.constant 0 : index
    %c0_36 = arith.constant 0 : index
    %34 = vector.load %arg9[%c0_34, %c0_35, %c0_36] : memref<1x8x384xf32, #tpu.memory_space<vmem>>, vector<1x8x384xf32>
    %35 = vector.shape_cast %34 : vector<1x8x384xf32> to vector<8x384xf32>
    %c0_37 = arith.constant 0 : index
    %c0_38 = arith.constant 0 : index
    %36 = vector.load %arg6[%c0_37, %c0_38] : memref<8x384xf32, #tpu.memory_space<vmem>>, vector<8x384xf32>
    %37 = arith.mulf %36, %35 : vector<8x384xf32>
    %38 = arith.addf %30, %37 : vector<8x384xf32>
    %cst_39 = arith.constant 5.000000e-01 : f32
    %39 = vector.broadcast %cst_39 : f32 to vector<8x384xf32>
    %40 = arith.mulf %39, %38 : vector<8x384xf32>
    %41 = math.tanh %40 : vector<8x384xf32>
    %cst_40 = arith.constant 5.000000e-01 : f32
    %42 = vector.broadcast %cst_40 : f32 to vector<8x384xf32>
    %43 = arith.mulf %42, %41 : vector<8x384xf32>
    %cst_41 = arith.constant 5.000000e-01 : f32
    %44 = vector.broadcast %cst_41 : f32 to vector<8x384xf32>
    %45 = arith.addf %43, %44 : vector<8x384xf32>
    %c0_42 = arith.constant 0 : index
    %c0_43 = arith.constant 0 : index
    %46 = vector.load %arg7[%c0_42, %c0_43] : memref<8x384xf32, #tpu.memory_space<vmem>>, vector<8x384xf32>
    %47 = arith.mulf %46, %35 : vector<8x384xf32>
    %48 = arith.addf %31, %47 : vector<8x384xf32>
    %cst_44 = arith.constant 5.000000e-01 : f32
    %49 = vector.broadcast %cst_44 : f32 to vector<8x384xf32>
    %50 = arith.mulf %49, %48 : vector<8x384xf32>
    %51 = math.tanh %50 : vector<8x384xf32>
    %cst_45 = arith.constant 5.000000e-01 : f32
    %52 = vector.broadcast %cst_45 : f32 to vector<8x384xf32>
    %53 = arith.mulf %52, %51 : vector<8x384xf32>
    %cst_46 = arith.constant 5.000000e-01 : f32
    %54 = vector.broadcast %cst_46 : f32 to vector<8x384xf32>
    %55 = arith.addf %53, %54 : vector<8x384xf32>
    %56 = arith.mulf %55, %35 : vector<8x384xf32>
    %57 = math.tanh %32 : vector<8x384xf32>
    %58 = arith.mulf %45, %57 : vector<8x384xf32>
    %59 = arith.addf %56, %58 : vector<8x384xf32>
    %c0_47 = arith.constant 0 : index
    %c0_48 = arith.constant 0 : index
    %60 = vector.load %arg8[%c0_47, %c0_48] : memref<8x384xf32, #tpu.memory_space<vmem>>, vector<8x384xf32>
    %61 = arith.mulf %60, %59 : vector<8x384xf32>
    %62 = arith.addf %33, %61 : vector<8x384xf32>
    %cst_49 = arith.constant 5.000000e-01 : f32
    %63 = vector.broadcast %cst_49 : f32 to vector<8x384xf32>
    %64 = arith.mulf %63, %62 : vector<8x384xf32>
    %65 = math.tanh %64 : vector<8x384xf32>
    %cst_50 = arith.constant 5.000000e-01 : f32
    %66 = vector.broadcast %cst_50 : f32 to vector<8x384xf32>
    %67 = arith.mulf %66, %65 : vector<8x384xf32>
    %cst_51 = arith.constant 5.000000e-01 : f32
    %68 = vector.broadcast %cst_51 : f32 to vector<8x384xf32>
    %69 = arith.addf %67, %68 : vector<8x384xf32>
    %70 = math.tanh %59 : vector<8x384xf32>
    %71 = arith.mulf %69, %70 : vector<8x384xf32>
    %c0_52 = arith.constant 0 : index
    %c0_53 = arith.constant 0 : index
    %c0_54 = arith.constant 0 : index
    %72 = vector.load %arg10[%c0_52, %c0_53, %c0_54] : memref<1x8x384xf32, #tpu.memory_space<vmem>>, vector<1x8x384xf32>
    %73 = vector.shape_cast %72 : vector<1x8x384xf32> to vector<8x384xf32>
    %74 = vector.shape_cast %71 : vector<8x384xf32> to vector<1x8x384xf32>
    tpu.vector_store %arg10[%c0_52, %c0_53, %c0_54], %74 {strides = array<i32>} : memref<1x8x384xf32, #tpu.memory_space<vmem>>, vector<1x8x384xf32>,
    %c0_55 = arith.constant 0 : index
    %c0_56 = arith.constant 0 : index
    %c0_57 = arith.constant 0 : index
    %75 = vector.load %arg11[%c0_55, %c0_56, %c0_57] : memref<1x8x384xf32, #tpu.memory_space<vmem>>, vector<1x8x384xf32>
    %76 = vector.shape_cast %75 : vector<1x8x384xf32> to vector<8x384xf32>
    %77 = vector.shape_cast %59 : vector<8x384xf32> to vector<1x8x384xf32>
    tpu.vector_store %arg11[%c0_55, %c0_56, %c0_57], %77 {strides = array<i32>} : memref<1x8x384xf32, #tpu.memory_space<vmem>>, vector<1x8x384xf32>,
    return
  }
  func.func @transform_0(%arg0: i32, %arg1: i32) -> (i32, i32, i32) {
    %c0_i32 = arith.constant 0 : i32
    %c0_i32_0 = arith.constant 0 : i32
    return %arg1, %c0_i32, %arg0 : i32, i32, i32
  }
  func.func @transform_1(%arg0: i32, %arg1: i32) -> (i32, i32, i32) {
    %c1_i32 = arith.constant 1 : i32
    %0 = arith.addi %arg0, %c1_i32 : i32
    %c3_i32 = arith.constant 3 : i32
    %1 = arith.muli %0, %c3_i32 : i32
    %c0_i32 = arith.constant 0 : i32
    %c0_i32_0 = arith.constant 0 : i32
    return %arg1, %c0_i32, %1 : i32, i32, i32
  }
  func.func @transform_2(%arg0: i32, %arg1: i32) -> (i32, i32) {
    %c0_i32 = arith.constant 0 : i32
    %c0_i32_0 = arith.constant 0 : i32
    %c0_i32_1 = arith.constant 0 : i32
    return %c0_i32, %c0_i32_0 : i32, i32
  }
  func.func @transform_3(%arg0: i32, %arg1: i32) -> (i32, i32) {
    %c0_i32 = arith.constant 0 : i32
    %c0_i32_0 = arith.constant 0 : i32
    %c0_i32_1 = arith.constant 0 : i32
    return %c0_i32, %c0_i32_0 : i32, i32
  }
  func.func @transform_4(%arg0: i32, %arg1: i32) -> (i32, i32) {
    %c0_i32 = arith.constant 0 : i32
    %c0_i32_0 = arith.constant 0 : i32
    return %c0_i32, %arg0 : i32, i32
  }
  func.func @transform_5(%arg0: i32, %arg1: i32) -> (i32, i32) {
    %c0_i32 = arith.constant 0 : i32
    %c0_i32_0 = arith.constant 0 : i32
    return %c0_i32, %arg0 : i32, i32
  }
  func.func @transform_6(%arg0: i32, %arg1: i32) -> (i32, i32) {
    %c0_i32 = arith.constant 0 : i32
    %c0_i32_0 = arith.constant 0 : i32
    return %c0_i32, %arg0 : i32, i32
  }
  func.func @transform_7(%arg0: i32, %arg1: i32) -> (i32, i32, i32) {
    %c0_i32 = arith.constant 0 : i32
    %c0_i32_0 = arith.constant 0 : i32
    return %arg1, %c0_i32, %arg0 : i32, i32, i32
  }
  func.func @transform_8(%arg0: i32, %arg1: i32) -> (i32, i32, i32) {
    %c0_i32 = arith.constant 0 : i32
    %c0_i32_0 = arith.constant 0 : i32
    return %arg1, %c0_i32, %arg0 : i32, i32, i32
  }
  func.func @transform_9(%arg0: i32, %arg1: i32) -> (i32, i32, i32) {
    %c0_i32 = arith.constant 0 : i32
    %c0_i32_0 = arith.constant 0 : i32
    return %arg1, %c0_i32, %arg0 : i32, i32, i32
  }
}

</mosaic_0001>

<llo_original>
// kernel: conv_lstm_cell.1
$region0: #{conv_lstm_cell.1}
  #allocation0 [shape = 'u32[]', space=smem, size = 0x4, offset = 0x4, fixed_abs, tag = 'smem constant byte address 0x4 - core index']
  #allocation1 [shape = 'u32[144,128]{1,0:T(1,128)}', space=vmem, size = 0x12000, scoped, tag = 'internal scratch']
  #allocation2 [shape = 'f32[16,512]{1,0:T(8,128)}', space=vmem, size = 0x8000, scoped, tag = 'scratch operand']
  #allocation3 [shape = 'f32[144,384]{1,0:T(8,128)}', space=vmem, size = 0x36000, scoped, tag = 'scratch operand']
  %s0 = inlined_call_operand.vmem [shape: f32[2,16,512], index: 0, kind: input, shape index: {}, may-alias: {0,1}]
  %s1 = inlined_call_operand.vmem [shape: f32[2,16,512], index: 1, kind: input, shape index: {}, may-alias: {0,1}]
  %s2 = inlined_call_operand.vmem [shape: f32[32,144], index: 2, kind: input, shape index: {}]
  %s3 = inlined_call_operand.vmem [shape: f32[32,1], index: 3, kind: input, shape index: {}]
  %s4 = inlined_call_operand.vmem [shape: f32[8,384], index: 4, kind: input, shape index: {}]
  %s5 = inlined_call_operand.vmem [shape: f32[8,384], index: 5, kind: input, shape index: {}]
  %s6 = inlined_call_operand.vmem [shape: f32[8,384], index: 6, kind: input, shape index: {}]
  %s7 = inlined_call_operand.vmem [shape: f32[2,8,384], index: 7, kind: input, shape index: {}, may-alias: {7,9}]
  %s8 = inlined_call_operand.vmem [shape: f32[2,8,384], index: 8, kind: output, shape index: {0}]
  %s9 = inlined_call_operand.vmem [shape: f32[2,8,384], index: 9, kind: output, shape index: {1}, may-alias: {7,9}]
  %10 = xla_tuple %s8, %s9
  %s11 = sld [smem:[#allocation0]]
  $region177: #{conv_lstm_cell.1} parent=0
    _
  %s13 = ssub.s32 1, %s11
  %s14 = scalar_select 0, %s13, %s11
  $region1: #{conv_lstm_cell.1} parent=0
    #allocation4 [shape = 'u8[49152]{0}', space=vmem, size = 0xc000, scoped, tag = 'input window, operand 0']
    #allocation5 [shape = 'u8[16384]{0}', space=vmem, size = 0x4000, scoped, tag = 'input window, operand 1']
    loop: start=0, step=1, limit=4
    $region2: #{conv_lstm_cell.1} parent=1 // loop_pre_header
      _
    $region3: #{conv_lstm_cell.1} parent=1 // loop_header
      %s16 = sphi 0, %s20
      %p17 = scmp.ge.s32.totalorder %s16, 4
      %s23 = sphi 0, %s35
      %s24 = sphi 0, %s31
      %s25 = sphi 0, %s23
      %s26 = sphi 0, %s24
      %s27 = sphi 0, %s25
      %s28 = sphi 0, %s26
      %s40 = sphi 0, %s42
      %s43 = sphi 0, %s40
      %s44 = sphi 0, %s43
      %s60 = sphi 0, %s44
      %s72 = sphi 0, %s74
      %s75 = sphi 0, %s72
      %s76 = sphi 0, %s75
      %s92 = sphi 0, %s76
      %s96 = sphi 0, %s96
      %s98 = sphi 0, %s96
      %s99 = sphi 0, %s98
      %s113 = sphi 0, %s99
      %s117 = sphi 0, %s117
      %s119 = sphi 0, %s117
      %s120 = sphi 0, %s119
      %s134 = sphi 0, %s120
      %s140 = sphi 0, %s142
      %s143 = sphi 0, %s140
      %s144 = sphi 0, %s143
      %s160 = sphi 0, %s144
      %s166 = sphi 0, %s168
      %s169 = sphi 0, %s166
      %s170 = sphi 0, %s169
      %s186 = sphi 0, %s170
      %s192 = sphi 0, %s194
      %s195 = sphi 0, %s192
      %s196 = sphi 0, %s195
      %s212 = sphi 0, %s196
      %s220 = sphi 0, %s222
      %s223 = sphi 0, %s220
      %s224 = sphi 0, %s223
      %s240 = sphi 0, %s224
      %s248 = sphi 0, %s250
      %s251 = sphi 0, %s248
      %s252 = sphi 0, %s251
      %s268 = sphi 0, %s252
      %s276 = sphi 0, %s278
      %s279 = sphi 0, %s276
      %s280 = sphi 0, %s279
      %s296 = sphi 0, %s280
    $region4: #{conv_lstm_cell.1} parent=1 // loop_header_branch
      %19 = sbr.rel (%p17) target = $region8
    $region5: #{conv_lstm_cell.1} parent=1 // loop_body
      %s21 = ssub.s32 %s16, 1
      %s22 = ssub.s32 %s16, 2
      %s29 = sadd.s32 1, %s24
      %p30 = scmp.ge.s32.totalorder %s29, 2
      %s31 = scalar_select %p30, 0, %s29
      %s32 = sadd.s32 1, %s23
      %s33 = scalar_select %p30, %s32, %s23
      %p34 = scmp.ge.s32.totalorder %s33, 1
      %s35 = scalar_select %p34, 0, %s33
      %s36 = ssub.s32 %s24, %s31
      %s37 = ssub.s32 %s23, %s35
      %s38 = sor.u32 %s36, %s37
      %p39 = scmp.eq.s32.totalorder %s38, 0
      %s41 = sadd.s32 %s40, 1
      %s42 = scalar_select %p39, %s40, %s41
      %p45 = pneg %p39
      %p46 = scmp.eq.s32.totalorder %s16, 1
      %p47 = por %p45, %p46
      %p48 = scmp.ne.s32.totalorder %s40, %s43
      %p49 = scmp.eq.s32.totalorder %s16, 0
      %p50 = por %p48, %p49
      %p51 = scmp.ne.s32.totalorder %s40, %s43
      %p52 = scmp.eq.s32.totalorder %s21, 1
      %p53 = por %p51, %p52
      %p54 = scmp.ne.s32.totalorder %s43, %s44
      %p55 = scmp.eq.s32.totalorder %s21, 0
      %p56 = por %p54, %p55
      %p57 = scmp.ne.s32.totalorder %s43, %s44
      %p58 = scmp.eq.s32.totalorder %s22, 1
      %p59 = por %p57, %p58
      %p61 = scmp.ne.s32.totalorder %s44, %s60
      %p62 = scmp.eq.s32.totalorder %s22, 0
      %p63 = por %p61, %p62
      %s64 = sadd.s32 %s23, 1
      %s65 = smul.u32 %s64, 3
      %s66 = sadd.s32 %s35, 1
      %s67 = smul.u32 %s66, 3
      %s68 = ssub.s32 %s24, %s31
      %s69 = ssub.s32 %s65, %s67
      %s70 = sor.u32 %s68, %s69
      %p71 = scmp.eq.s32.totalorder %s70, 0
      %s73 = sadd.s32 %s72, 1
      %s74 = scalar_select %p71, %s72, %s73
      %p77 = pneg %p71
      %p78 = scmp.eq.s32.totalorder %s16, 1
      %p79 = por %p77, %p78
      %p80 = scmp.ne.s32.totalorder %s72, %s75
      %p81 = scmp.eq.s32.totalorder %s16, 0
      %p82 = por %p80, %p81
      %p83 = scmp.ne.s32.totalorder %s72, %s75
      %p84 = scmp.eq.s32.totalorder %s21, 1
      %p85 = por %p83, %p84
      %p86 = scmp.ne.s32.totalorder %s75, %s76
      %p87 = scmp.eq.s32.totalorder %s21, 0
      %p88 = por %p86, %p87
      %p89 = scmp.ne.s32.totalorder %s75, %s76
      %p90 = scmp.eq.s32.totalorder %s22, 1
      %p91 = por %p89, %p90
      %p93 = scmp.ne.s32.totalorder %s76, %s92
      %p94 = scmp.eq.s32.totalorder %s22, 0
      %p95 = por %p93, %p94
      %s97 = sadd.s32 %s96, 1
      %p100 = scmp.eq.s32.totalorder %s16, 1
      %p101 = scmp.ne.s32.totalorder %s96, %s98
      %p102 = scmp.eq.s32.totalorder %s16, 0
      %p103 = por %p101, %p102
      %p104 = scmp.ne.s32.totalorder %s96, %s98
      %p105 = scmp.eq.s32.totalorder %s21, 1
      %p106 = por %p104, %p105
      %p107 = scmp.ne.s32.totalorder %s98, %s99
      %p108 = scmp.eq.s32.totalorder %s21, 0
      %p109 = por %p107, %p108
      %p110 = scmp.ne.s32.totalorder %s98, %s99
      %p111 = scmp.eq.s32.totalorder %s22, 1
      %p112 = por %p110, %p111
      %p114 = scmp.ne.s32.totalorder %s99, %s113
      %p115 = scmp.eq.s32.totalorder %s22, 0
      %p116 = por %p114, %p115
      %s118 = sadd.s32 %s117, 1
      %p121 = scmp.eq.s32.totalorder %s16, 1
      %p122 = scmp.ne.s32.totalorder %s117, %s119
      %p123 = scmp.eq.s32.totalorder %s16, 0
      %p124 = por %p122, %p123
      %p125 = scmp.ne.s32.totalorder %s117, %s119
      %p126 = scmp.eq.s32.totalorder %s21, 1
      %p127 = por %p125, %p126
      %p128 = scmp.ne.s32.totalorder %s119, %s120
      %p129 = scmp.eq.s32.totalorder %s21, 0
      %p130 = por %p128, %p129
      %p131 = scmp.ne.s32.totalorder %s119, %s120
      %p132 = scmp.eq.s32.totalorder %s22, 1
      %p133 = por %p131, %p132
      %p135 = scmp.ne.s32.totalorder %s120, %s134
      %p136 = scmp.eq.s32.totalorder %s22, 0
      %p137 = por %p135, %p136
      %s138 = ssub.s32 %s23, %s35
      %p139 = scmp.eq.s32.totalorder %s138, 0
      %s141 = sadd.s32 %s140, 1
      %s142 = scalar_select %p139, %s140, %s141
      %p145 = pneg %p139
      %p146 = scmp.eq.s32.totalorder %s16, 1
      %p147 = por %p145, %p146
      %p148 = scmp.ne.s32.totalorder %s140, %s143
      %p149 = scmp.eq.s32.totalorder %s16, 0
      %p150 = por %p148, %p149
      %p151 = scmp.ne.s32.totalorder %s140, %s143
      %p152 = scmp.eq.s32.totalorder %s21, 1
      %p153 = por %p151, %p152
      %p154 = scmp.ne.s32.totalorder %s143, %s144
      %p155 = scmp.eq.s32.totalorder %s21, 0
      %p156 = por %p154, %p155
      %p157 = scmp.ne.s32.totalorder %s143, %s144
      %p158 = scmp.eq.s32.totalorder %s22, 1
      %p159 = por %p157, %p158
      %p161 = scmp.ne.s32.totalorder %s144, %s160
      %p162 = scmp.eq.s32.totalorder %s22, 0
      %p163 = por %p161, %p162
      %s164 = ssub.s32 %s23, %s35
      %p165 = scmp.eq.s32.totalorder %s164, 0
      %s167 = sadd.s32 %s166, 1
      %s168 = scalar_select %p165, %s166, %s167
      %p171 = pneg %p165
      %p172 = scmp.eq.s32.totalorder %s16, 1
      %p173 = por %p171, %p172
      %p174 = scmp.ne.s32.totalorder %s166, %s169
      %p175 = scmp.eq.s32.totalorder %s16, 0
      %p176 = por %p174, %p175
      %p177 = scmp.ne.s32.totalorder %s166, %s169
      %p178 = scmp.eq.s32.totalorder %s21, 1
      %p179 = por %p177, %p178
      %p180 = scmp.ne.s32.totalorder %s169, %s170
      %p181 = scmp.eq.s32.totalorder %s21, 0
      %p182 = por %p180, %p181
      %p183 = scmp.ne.s32.totalorder %s169, %s170
      %p184 = scmp.eq.s32.totalorder %s22, 1
      %p185 = por %p183, %p184
      %p187 = scmp.ne.s32.totalorder %s170, %s186
      %p188 = scmp.eq.s32.totalorder %s22, 0
      %p189 = por %p187, %p188
      %s190 = ssub.s32 %s23, %s35
      %p191 = scmp.eq.s32.totalorder %s190, 0
      %s193 = sadd.s32 %s192, 1
      %s194 = scalar_select %p191, %s192, %s193
      %p197 = pneg %p191
      %p198 = scmp.eq.s32.totalorder %s16, 1
      %p199 = por %p197, %p198
      %p200 = scmp.ne.s32.totalorder %s192, %s195
      %p201 = scmp.eq.s32.totalorder %s16, 0
      %p202 = por %p200, %p201
      %p203 = scmp.ne.s32.totalorder %s192, %s195
      %p204 = scmp.eq.s32.totalorder %s21, 1
      %p205 = por %p203, %p204
      %p206 = scmp.ne.s32.totalorder %s195, %s196
      %p207 = scmp.eq.s32.totalorder %s21, 0
      %p208 = por %p206, %p207
      %p209 = scmp.ne.s32.totalorder %s195, %s196
      %p210 = scmp.eq.s32.totalorder %s22, 1
      %p211 = por %p209, %p210
      %p213 = scmp.ne.s32.totalorder %s196, %s212
      %p214 = scmp.eq.s32.totalorder %s22, 0
      %p215 = por %p213, %p214
      %s216 = ssub.s32 %s24, %s31
      %s217 = ssub.s32 %s23, %s35
      %s218 = sor.u32 %s216, %s217
      %p219 = scmp.eq.s32.totalorder %s218, 0
      %s221 = sadd.s32 %s220, 1
      %s222 = scalar_select %p219, %s220, %s221
      %p225 = pneg %p219
      %p226 = scmp.eq.s32.totalorder %s16, 1
      %p227 = por %p225, %p226
      %p228 = scmp.ne.s32.totalorder %s220, %s223
      %p229 = scmp.eq.s32.totalorder %s16, 0
      %p230 = por %p228, %p229
      %p231 = scmp.ne.s32.totalorder %s220, %s223
      %p232 = scmp.eq.s32.totalorder %s21, 1
      %p233 = por %p231, %p232
      %p234 = scmp.ne.s32.totalorder %s223, %s224
      %p235 = scmp.eq.s32.totalorder %s21, 0
      %p236 = por %p234, %p235
      %p237 = scmp.ne.s32.totalorder %s223, %s224
      %p238 = scmp.eq.s32.totalorder %s22, 1
      %p239 = por %p237, %p238
      %p241 = scmp.ne.s32.totalorder %s224, %s240
      %p242 = scmp.eq.s32.totalorder %s22, 0
      %p243 = por %p241, %p242
      %s244 = ssub.s32 %s24, %s31
      %s245 = ssub.s32 %s23, %s35
      %s246 = sor.u32 %s244, %s245
      %p247 = scmp.eq.s32.totalorder %s246, 0
      %s249 = sadd.s32 %s248, 1
      %s250 = scalar_select %p247, %s248, %s249
      %p253 = pneg %p247
      %p254 = scmp.eq.s32.totalorder %s16, 1
      %p255 = por %p253, %p254
      %p256 = scmp.ne.s32.totalorder %s248, %s251
      %p257 = scmp.eq.s32.totalorder %s16, 0
      %p258 = por %p256, %p257
      %p259 = scmp.ne.s32.totalorder %s248, %s251
      %p260 = scmp.eq.s32.totalorder %s21, 1
      %p261 = por %p259, %p260
      %p262 = scmp.ne.s32.totalorder %s251, %s252
      %p263 = scmp.eq.s32.totalorder %s21, 0
      %p264 = por %p262, %p263
      %p265 = scmp.ne.s32.totalorder %s251, %s252
      %p266 = scmp.eq.s32.totalorder %s22, 1
      %p267 = por %p265, %p266
      %p269 = scmp.ne.s32.totalorder %s252, %s268
      %p270 = scmp.eq.s32.totalorder %s22, 0
      %p271 = por %p269, %p270
      %s272 = ssub.s32 %s24, %s31
      %s273 = ssub.s32 %s23, %s35
      %s274 = sor.u32 %s272, %s273
      %p275 = scmp.eq.s32.totalorder %s274, 0
      %s277 = sadd.s32 %s276, 1
      %s278 = scalar_select %p275, %s276, %s277
      %p281 = pneg %p275
      %p282 = scmp.eq.s32.totalorder %s16, 1
      %p283 = por %p281, %p282
      %p284 = scmp.ne.s32.totalorder %s276, %s279
      %p285 = scmp.eq.s32.totalorder %s16, 0
      %p286 = por %p284, %p285
      %p287 = scmp.ne.s32.totalorder %s276, %s279
      %p288 = scmp.eq.s32.totalorder %s21, 1
      %p289 = por %p287, %p288
      %p290 = scmp.ne.s32.totalorder %s279, %s280
      %p291 = scmp.eq.s32.totalorder %s21, 0
      %p292 = por %p290, %p291
      %p293 = scmp.ne.s32.totalorder %s279, %s280
      %p294 = scmp.eq.s32.totalorder %s22, 1
      %p295 = por %p293, %p294
      %p297 = scmp.ne.s32.totalorder %s280, %s296
      %p298 = scmp.eq.s32.totalorder %s22, 0
      %p299 = por %p297, %p298
      %p300 = scmp.le.s32.totalorder 1, %s16
      %p301 = scmp.lt.s32.totalorder %s16, 3
      %p302 = pnand %p300, %p301
      %p303 = pneg %p302
      // Predicated region
      $region9: #{conv_lstm_cell.1} parent=5 // pred_check
        _
      $region10: #{conv_lstm_cell.1} parent=5 // pred_check_branch
        %305 = sbr.rel (%p302) target = $region12
      $region11: #{conv_lstm_cell.1} parent=5 // pred_region
        %s306 = ssub.s32 %s16, 1
        // Predicated region
        $region13: #{conv_lstm_cell.1} parent=11 // pred_check
          %p307 = pneg %p109
        $region14: #{conv_lstm_cell.1} parent=11 // pred_check_branch
          %309 = sbr.rel (%p307) target = $region16
        $region15: #{conv_lstm_cell.1} parent=11 // pred_region
          _
        $region16: #{conv_lstm_cell.1} parent=11 // pred_fallthru
          _
        // Predicated region
        $region17: #{conv_lstm_cell.1} parent=11 // pred_check
          %p310 = pneg %p130
        $region18: #{conv_lstm_cell.1} parent=11 // pred_check_branch
          %312 = sbr.rel (%p310) target = $region20
        $region19: #{conv_lstm_cell.1} parent=11 // pred_region
          _
        $region20: #{conv_lstm_cell.1} parent=11 // pred_fallthru
          _
        // Predicated region
        $region21: #{conv_lstm_cell.1} parent=11 // pred_check
          %p313 = pneg %p156
        $region22: #{conv_lstm_cell.1} parent=11 // pred_check_branch
          %315 = sbr.rel (%p313) target = $region24
        $region23: #{conv_lstm_cell.1} parent=11 // pred_region
          %s316 = smul.u32 3, %s25
          %p317 = scmp.lt.s32.totalorder %s316, 2
          %s318 = scalar_select %p317, %s316, 2
          %s319 = smul.addr %s318, 8
          %s320 = scalar_lea.vmem %s4, %s319
          %s321 = smul.u32 3, %s25
        $region24: #{conv_lstm_cell.1} parent=11 // pred_fallthru
          _
        // Predicated region
        $region25: #{conv_lstm_cell.1} parent=11 // pred_check
          %p322 = pneg %p182
        $region26: #{conv_lstm_cell.1} parent=11 // pred_check_branch
          %324 = sbr.rel (%p322) target = $region28
        $region27: #{conv_lstm_cell.1} parent=11 // pred_region
          %s325 = smul.u32 3, %s25
          %p326 = scmp.lt.s32.totalorder %s325, 2
          %s327 = scalar_select %p326, %s325, 2
          %s328 = smul.addr %s327, 8
          %s329 = scalar_lea.vmem %s5, %s328
          %s330 = smul.u32 3, %s25
        $region28: #{conv_lstm_cell.1} parent=11 // pred_fallthru
          _
        // Predicated region
        $region29: #{conv_lstm_cell.1} parent=11 // pred_check
          %p331 = pneg %p208
        $region30: #{conv_lstm_cell.1} parent=11 // pred_check_branch
          %333 = sbr.rel (%p331) target = $region32
        $region31: #{conv_lstm_cell.1} parent=11 // pred_region
          %s334 = smul.u32 3, %s25
          %p335 = scmp.lt.s32.totalorder %s334, 2
          %s336 = scalar_select %p335, %s334, 2
          %s337 = smul.addr %s336, 8
          %s338 = scalar_lea.vmem %s6, %s337
          %s339 = smul.u32 3, %s25
        $region32: #{conv_lstm_cell.1} parent=11 // pred_fallthru
          _
      $region12: #{conv_lstm_cell.1} parent=5 // pred_fallthru
        _
      %p340 = scmp.lt.s32.totalorder %s16, 2
      // Predicated region
      $region33: #{conv_lstm_cell.1} parent=5 // pred_check
        %p341 = pneg %p340
      $region34: #{conv_lstm_cell.1} parent=5 // pred_check_branch
        %343 = sbr.rel (%p341) target = $region36
      $region35: #{conv_lstm_cell.1} parent=5 // pred_region
        // Predicated region
        $region37: #{conv_lstm_cell.1} parent=35 // pred_check
          %p344 = pneg %p50
        $region38: #{conv_lstm_cell.1} parent=35 // pred_check_branch
          %346 = sbr.rel (%p344) target = $region40
        $region39: #{conv_lstm_cell.1} parent=35 // pred_region
          %s347 = sand.u32 %s40, 1
          %s348 = sand.u32 %s40, 1
          %s349 = smul.addr %s348, 48
          %s350 = scalar_lea.vmem [#allocation4], %s349
          %s351 = smul.u32 3, %s23
          %s352 = ssub.s32 4, %s351
          %p353 = scmp.lt.s32.totalorder %s352, 3
          %s354 = scalar_select %p353, %s352, 3
          %s355 = smul.u32 256, %s354
          %p356 = scmp.ne.s32.totalorder 0, %s355
          %s357 = smul.addr %s24, 8
          %s358 = sadd.s32 %s351, %s357
          %s359 = smul.addr %s358, 8
          %s360 = scalar_lea.vmem %s0, %s359
          %s361 = smul.u32 %s354, 8
          // Predicated region
          $region41: #{conv_lstm_cell.1} parent=39 // pred_check
            %p362 = pneg %p356
          $region42: #{conv_lstm_cell.1} parent=39 // pred_check_branch
            %364 = sbr.rel (%p362) target = $region44
          $region43: #{conv_lstm_cell.1} parent=39 // pred_region
            %p365 = scmp.lt.u32.totalorder %s361, 8
            %p366 = pneg %p365
            // Predicated region
            $region45: #{conv_lstm_cell.1} parent=43 // pred_check
              _
            $region46: #{conv_lstm_cell.1} parent=43 // pred_check_branch
              %368 = sbr.rel (%p365) target = $region48
            $region47: #{conv_lstm_cell.1} parent=43 // pred_region
              %s386 = sand.u32 %s361, 7
              %p387 = scmp.eq.s32.totalorder %s386, 0
              // Predicated region
              $region60: #{conv_lstm_cell.1} parent=47 // pred_check
                %p388 = pneg %p387
              $region61: #{conv_lstm_cell.1} parent=47 // pred_check_branch
                %390 = sbr.rel (%p388) target = $region63
              $region62: #{conv_lstm_cell.1} parent=47 // pred_region
                %s391 = sshrl.u32 %s361, 3
                %s392 = sshrl.u32 %s391, 5
                // While loop
                $region64: #{conv_lstm_cell.1} parent=62 // loop_pre_header
                  _
                $region65: #{conv_lstm_cell.1} parent=62 // loop_header
                  %s396 = sphi 0, %s398
                  %p397 = scmp.ge.s32.totalorder %s396, %s392
                  %s401 = sphi 0, %s534
                  %s402 = sphi %s360, %s537
                  %s403 = sphi %s350, %s538
                $region66: #{conv_lstm_cell.1} parent=62 // loop_header_branch
                  %400 = sbr.rel (%p397) target = $region70
                $region67: #{conv_lstm_cell.1} parent=62 // loop_body
                  %v404 = vld [vmem:[%s402] sm:$0xff]
                  %405 = vst [vmem:[%s403] sm:$0xff] %v404
                  %v406 = vld [vmem:[%s402 + $0x8] sm:$0xff]
                  %407 = vst [vmem:[%s403 + $0x8] sm:$0xff] %v406
                  %v408 = vld [vmem:[%s402 + $0x10] sm:$0xff]
                  %409 = vst [vmem:[%s403 + $0x10] sm:$0xff] %v408
                  %v410 = vld [vmem:[%s402 + $0x18] sm:$0xff]
                  %411 = vst [vmem:[%s403 + $0x18] sm:$0xff] %v410
                  %v412 = vld [vmem:[%s402 + $0x20] sm:$0xff]
                  %413 = vst [vmem:[%s403 + $0x20] sm:$0xff] %v412
                  %v414 = vld [vmem:[%s402 + $0x28] sm:$0xff]
                  %415 = vst [vmem:[%s403 + $0x28] sm:$0xff] %v414
                  %v416 = vld [vmem:[%s402 + $0x30] sm:$0xff]
                  %417 = vst [vmem:[%s403 + $0x30] sm:$0xff] %v416
                  %v418 = vld [vmem:[%s402 + $0x38] sm:$0xff]
                  %419 = vst [vmem:[%s403 + $0x38] sm:$0xff] %v418
                  %v420 = vld [vmem:[%s402 + $0x40] sm:$0xff]
                  %421 = vst [vmem:[%s403 + $0x40] sm:$0xff] %v420
                  %v422 = vld [vmem:[%s402 + $0x48] sm:$0xff]
                  %423 = vst [vmem:[%s403 + $0x48] sm:$0xff] %v422
                  %v424 = vld [vmem:[%s402 + $0x50] sm:$0xff]
                  %425 = vst [vmem:[%s403 + $0x50] sm:$0xff] %v424
                  %v426 = vld [vmem:[%s402 + $0x58] sm:$0xff]
                  %427 = vst [vmem:[%s403 + $0x58] sm:$0xff] %v426
                  %v428 = vld [vmem:[%s402 + $0x60] sm:$0xff]
                  %429 = vst [vmem:[%s403 + $0x60] sm:$0xff] %v428
                  %v430 = vld [vmem:[%s402 + $0x68] sm:$0xff]
                  %431 = vst [vmem:[%s403 + $0x68] sm:$0xff] %v430
                  %v432 = vld [vmem:[%s402 + $0x70] sm:$0xff]
                  %433 = vst [vmem:[%s403 + $0x70] sm:$0xff] %v432
                  %v434 = vld [vmem:[%s402 + $0x78] sm:$0xff]
                  %435 = vst [vmem:[%s403 + $0x78] sm:$0xff] %v434
                  %v436 = vld [vmem:[%s402 + $0x80] sm:$0xff]
                  %437 = vst [vmem:[%s403 + $0x80] sm:$0xff] %v436
                  %v438 = vld [vmem:[%s402 + $0x88] sm:$0xff]
                  %439 = vst [vmem:[%s403 + $0x88] sm:$0xff] %v438
                  %v440 = vld [vmem:[%s402 + $0x90] sm:$0xff]
                  %441 = vst [vmem:[%s403 + $0x90] sm:$0xff] %v440
                  %v442 = vld [vmem:[%s402 + $0x98] sm:$0xff]
                  %443 = vst [vmem:[%s403 + $0x98] sm:$0xff] %v442
                  %v444 = vld [vmem:[%s402 + $0xa0] sm:$0xff]
                  %445 = vst [vmem:[%s403 + $0xa0] sm:$0xff] %v444
                  %v446 = vld [vmem:[%s402 + $0xa8] sm:$0xff]
                  %447 = vst [vmem:[%s403 + $0xa8] sm:$0xff] %v446
                  %v448 = vld [vmem:[%s402 + $0xb0] sm:$0xff]
                  %449 = vst [vmem:[%s403 + $0xb0] sm:$0xff] %v448
                  %v450 = vld [vmem:[%s402 + $0xb8] sm:$0xff]
                  %451 = vst [vmem:[%s403 + $0xb8] sm:$0xff] %v450
                  %v452 = vld [vmem:[%s402 + $0xc0] sm:$0xff]
                  %453 = vst [vmem:[%s403 + $0xc0] sm:$0xff] %v452
                  %v454 = vld [vmem:[%s402 + $0xc8] sm:$0xff]
                  %455 = vst [vmem:[%s403 + $0xc8] sm:$0xff] %v454
                  %v456 = vld [vmem:[%s402 + $0xd0] sm:$0xff]
                  %457 = vst [vmem:[%s403 + $0xd0] sm:$0xff] %v456
                  %v458 = vld [vmem:[%s402 + $0xd8] sm:$0xff]
                  %459 = vst [vmem:[%s403 + $0xd8] sm:$0xff] %v458
                  %v460 = vld [vmem:[%s402 + $0xe0] sm:$0xff]
                  %461 = vst [vmem:[%s403 + $0xe0] sm:$0xff] %v460
                  %v462 = vld [vmem:[%s402 + $0xe8] sm:$0xff]
                  %463 = vst [vmem:[%s403 + $0xe8] sm:$0xff] %v462
                  %v464 = vld [vmem:[%s402 + $0xf0] sm:$0xff]
                  %465 = vst [vmem:[%s403 + $0xf0] sm:$0xff] %v464
                  %v466 = vld [vmem:[%s402 + $0xf8] sm:$0xff]
                  %467 = vst [vmem:[%s403 + $0xf8] sm:$0xff] %v466
                  %v468 = vld [vmem:[%s402 + $0x20] sm:$0xff]
                  %469 = vst [vmem:[%s403 + $0x18] sm:$0xff] %v468
                  %v470 = vld [vmem:[%s402 + $0x28] sm:$0xff]
                  %471 = vst [vmem:[%s403 + $0x20] sm:$0xff] %v470
                  %v472 = vld [vmem:[%s402 + $0x30] sm:$0xff]
                  %473 = vst [vmem:[%s403 + $0x28] sm:$0xff] %v472
                  %v474 = vld [vmem:[%s402 + $0x38] sm:$0xff]
                  %475 = vst [vmem:[%s403 + $0x30] sm:$0xff] %v474
                  %v476 = vld [vmem:[%s402 + $0x40] sm:$0xff]
                  %477 = vst [vmem:[%s403 + $0x38] sm:$0xff] %v476
                  %v478 = vld [vmem:[%s402 + $0x48] sm:$0xff]
                  %479 = vst [vmem:[%s403 + $0x40] sm:$0xff] %v478
                  %v480 = vld [vmem:[%s402 + $0x50] sm:$0xff]
                  %481 = vst [vmem:[%s403 + $0x48] sm:$0xff] %v480
                  %v482 = vld [vmem:[%s402 + $0x58] sm:$0xff]
                  %483 = vst [vmem:[%s403 + $0x50] sm:$0xff] %v482
                  %v484 = vld [vmem:[%s402 + $0x60] sm:$0xff]
                  %485 = vst [vmem:[%s403 + $0x58] sm:$0xff] %v484
                  %v486 = vld [vmem:[%s402 + $0x68] sm:$0xff]
                  %487 = vst [vmem:[%s403 + $0x60] sm:$0xff] %v486
                  %v488 = vld [vmem:[%s402 + $0x70] sm:$0xff]
                  %489 = vst [vmem:[%s403 + $0x68] sm:$0xff] %v488
                  %v490 = vld [vmem:[%s402 + $0x78] sm:$0xff]
                  %491 = vst [vmem:[%s403 + $0x70] sm:$0xff] %v490
                  %v492 = vld [vmem:[%s402 + $0x80] sm:$0xff]
                  %493 = vst [vmem:[%s403 + $0x78] sm:$0xff] %v492
                  %v494 = vld [vmem:[%s402 + $0x88] sm:$0xff]
                  %495 = vst [vmem:[%s403 + $0x80] sm:$0xff] %v494
                  %v496 = vld [vmem:[%s402 + $0x90] sm:$0xff]
                  %497 = vst [vmem:[%s403 + $0x88] sm:$0xff] %v496
                  %v498 = vld [vmem:[%s402 + $0x98] sm:$0xff]
                  %499 = vst [vmem:[%s403 + $0x90] sm:$0xff] %v498
                  %v500 = vld [vmem:[%s402 + $0xa0] sm:$0xff]
                  %501 = vst [vmem:[%s403 + $0x98] sm:$0xff] %v500
                  %v502 = vld [vmem:[%s402 + $0xa8] sm:$0xff]
                  %503 = vst [vmem:[%s403 + $0xa0] sm:$0xff] %v502
                  %v504 = vld [vmem:[%s402 + $0xb0] sm:$0xff]
                  %505 = vst [vmem:[%s403 + $0xa8] sm:$0xff] %v504
                  %v506 = vld [vmem:[%s402 + $0xb8] sm:$0xff]
                  %507 = vst [vmem:[%s403 + $0xb0] sm:$0xff] %v506
                  %v508 = vld [vmem:[%s402 + $0xc0] sm:$0xff]
                  %509 = vst [vmem:[%s403 + $0xb8] sm:$0xff] %v508
                  %v510 = vld [vmem:[%s402 + $0xc8] sm:$0xff]
                  %511 = vst [vmem:[%s403 + $0xc0] sm:$0xff] %v510
                  %v512 = vld [vmem:[%s402 + $0xd0] sm:$0xff]
                  %513 = vst [vmem:[%s403 + $0xc8] sm:$0xff] %v512
                  %v514 = vld [vmem:[%s402 + $0xd8] sm:$0xff]
                  %515 = vst [vmem:[%s403 + $0xd0] sm:$0xff] %v514
                  %v516 = vld [vmem:[%s402 + $0xe0] sm:$0xff]
                  %517 = vst [vmem:[%s403 + $0xd8] sm:$0xff] %v516
                  %v518 = vld [vmem:[%s402 + $0xe8] sm:$0xff]
                  %519 = vst [vmem:[%s403 + $0xe0] sm:$0xff] %v518
                  %v520 = vld [vmem:[%s402 + $0xf0] sm:$0xff]
                  %521 = vst [vmem:[%s403 + $0xe8] sm:$0xff] %v520
                  %v522 = vld [vmem:[%s402 + $0xf8] sm:$0xff]
                  %523 = vst [vmem:[%s403 + $0xf0] sm:$0xff] %v522
                  %v524 = vld [vmem:[%s402 + $0x100] sm:$0xff]
                  %525 = vst [vmem:[%s403 + $0xf8] sm:$0xff] %v524
                  %v526 = vld [vmem:[%s402 + $0x108] sm:$0xff]
                  %527 = vst [vmem:[%s403 + $0x100] sm:$0xff] %v526
                  %v528 = vld [vmem:[%s402 + $0x110] sm:$0xff]
                  %529 = vst [vmem:[%s403 + $0x108] sm:$0xff] %v528
                  %v530 = vld [vmem:[%s402 + $0x118] sm:$0xff]
                  %531 = vst [vmem:[%s403 + $0x110] sm:$0xff] %v530
                  %s532 = sadd.s32 1, %s401
                  %p533 = scmp.ge.s32.totalorder %s532, %s392
                  %s534 = scalar_select %p533, 0, %s532
                  %s535 = smul.u32 %s534, 256
                  %s536 = smul.u32 %s534, 256
                  %s537 = scalar_lea.vmem %s360, %s535
                  %s538 = scalar_lea.vmem %s350, %s536 [#allocation4]
                $region68: #{conv_lstm_cell.1} parent=62 // loop_footer
                  %s398 = sadd.s32 %s396, 1
                $region69: #{conv_lstm_cell.1} parent=62 // loop_footer_branch
                  %395 = sbr.rel target = $region65
                $region70: #{conv_lstm_cell.1} parent=62 // loop_exit
                  _
                %s539 = sshrl.u32 %s391, 5
                %s540 = sand.u32 %s391, 31
                %s541 = smul.u32 %s539, 32
                %s542 = smul.u32 128, %s541
                %s543 = sshra.s32 %s542, 4
                %s544 = scalar_lea.vmem %s360, %s543
                %s545 = smul.u32 128, %s541
                %s546 = sshra.s32 %s545, 4
                %s547 = scalar_lea.vmem %s350, %s546 [#allocation4]
                // While loop
                $region71: #{conv_lstm_cell.1} parent=62 // loop_pre_header
                  _
                $region72: #{conv_lstm_cell.1} parent=62 // loop_header
                  %s551 = sphi 0, %s553
                  %p552 = scmp.ge.s32.totalorder %s551, %s540
                  %s556 = sphi 0, %s565
                  %s557 = sphi %s544, %s568
                  %s558 = sphi %s547, %s569
                $region73: #{conv_lstm_cell.1} parent=62 // loop_header_branch
                  %555 = sbr.rel (%p552) target = $region77
                $region74: #{conv_lstm_cell.1} parent=62 // loop_body
                  %v559 = vld [vmem:[%s557] sm:$0xff]
                  %560 = vst [vmem:[%s558] sm:$0xff] %v559
                  %v561 = vld [vmem:[%s557 + $0x20] sm:$0xff]
                  %562 = vst [vmem:[%s558 + $0x18] sm:$0xff] %v561
                  %s563 = sadd.s32 1, %s556
                  %p564 = scmp.ge.s32.totalorder %s563, %s540
                  %s565 = scalar_select %p564, 0, %s563
                  %s566 = smul.u32 %s565, 8
                  %s567 = smul.u32 %s565, 8
                  %s568 = scalar_lea.vmem %s544, %s566
                  %s569 = scalar_lea.vmem %s547, %s567 [#allocation4]
                $region75: #{conv_lstm_cell.1} parent=62 // loop_footer
                  %s553 = sadd.s32 %s551, 1
                $region76: #{conv_lstm_cell.1} parent=62 // loop_footer_branch
                  %550 = sbr.rel target = $region72
                $region77: #{conv_lstm_cell.1} parent=62 // loop_exit
                  _
              $region63: #{conv_lstm_cell.1} parent=47 // pred_fallthru
                _
              %p570 = pneg %p387
              // Predicated region
              $region78: #{conv_lstm_cell.1} parent=47 // pred_check
                _
              $region79: #{conv_lstm_cell.1} parent=47 // pred_check_branch
                %572 = sbr.rel (%p387) target = $region81
              $region80: #{conv_lstm_cell.1} parent=47 // pred_region
                %s573 = sand.u32 %s361, 7
                %s574 = ssub.s32 %s361, %s573
                %s575 = scalar_lea.vmem %s360, %s574
                %s576 = ssub.s32 %s361, %s573
                %s577 = scalar_lea.vmem %s350, %s576 [#allocation4]
                %s578 = sshrl.u32 %s361, 3
                %s579 = sshrl.u32 %s578, 5
                // While loop
                $region82: #{conv_lstm_cell.1} parent=80 // loop_pre_header
                  _
                $region83: #{conv_lstm_cell.1} parent=80 // loop_header
                  %s583 = sphi 0, %s585
                  %p584 = scmp.ge.s32.totalorder %s583, %s579
                  %s588 = sphi 0, %s721
                  %s589 = sphi %s360, %s724
                  %s590 = sphi %s350, %s725
                $region84: #{conv_lstm_cell.1} parent=80 // loop_header_branch
                  %587 = sbr.rel (%p584) target = $region88
                $region85: #{conv_lstm_cell.1} parent=80 // loop_body
                  %v591 = vld [vmem:[%s589] sm:$0xff]
                  %592 = vst [vmem:[%s590] sm:$0xff] %v591
                  %v593 = vld [vmem:[%s589 + $0x8] sm:$0xff]
                  %594 = vst [vmem:[%s590 + $0x8] sm:$0xff] %v593
                  %v595 = vld [vmem:[%s589 + $0x10] sm:$0xff]
                  %596 = vst [vmem:[%s590 + $0x10] sm:$0xff] %v595
                  %v597 = vld [vmem:[%s589 + $0x18] sm:$0xff]
                  %598 = vst [vmem:[%s590 + $0x18] sm:$0xff] %v597
                  %v599 = vld [vmem:[%s589 + $0x20] sm:$0xff]
                  %600 = vst [vmem:[%s590 + $0x20] sm:$0xff] %v599
                  %v601 = vld [vmem:[%s589 + $0x28] sm:$0xff]
                  %602 = vst [vmem:[%s590 + $0x28] sm:$0xff] %v601
                  %v603 = vld [vmem:[%s589 + $0x30] sm:$0xff]
                  %604 = vst [vmem:[%s590 + $0x30] sm:$0xff] %v603
                  %v605 = vld [vmem:[%s589 + $0x38] sm:$0xff]
                  %606 = vst [vmem:[%s590 + $0x38] sm:$0xff] %v605
                  %v607 = vld [vmem:[%s589 + $0x40] sm:$0xff]
                  %608 = vst [vmem:[%s590 + $0x40] sm:$0xff] %v607
                  %v609 = vld [vmem:[%s589 + $0x48] sm:$0xff]
                  %610 = vst [vmem:[%s590 + $0x48] sm:$0xff] %v609
                  %v611 = vld [vmem:[%s589 + $0x50] sm:$0xff]
                  %612 = vst [vmem:[%s590 + $0x50] sm:$0xff] %v611
                  %v613 = vld [vmem:[%s589 + $0x58] sm:$0xff]
                  %614 = vst [vmem:[%s590 + $0x58] sm:$0xff] %v613
                  %v615 = vld [vmem:[%s589 + $0x60] sm:$0xff]
                  %616 = vst [vmem:[%s590 + $0x60] sm:$0xff] %v615
                  %v617 = vld [vmem:[%s589 + $0x68] sm:$0xff]
                  %618 = vst [vmem:[%s590 + $0x68] sm:$0xff] %v617
                  %v619 = vld [vmem:[%s589 + $0x70] sm:$0xff]
                  %620 = vst [vmem:[%s590 + $0x70] sm:$0xff] %v619
                  %v621 = vld [vmem:[%s589 + $0x78] sm:$0xff]
                  %622 = vst [vmem:[%s590 + $0x78] sm:$0xff] %v621
                  %v623 = vld [vmem:[%s589 + $0x80] sm:$0xff]
                  %624 = vst [vmem:[%s590 + $0x80] sm:$0xff] %v623
                  %v625 = vld [vmem:[%s589 + $0x88] sm:$0xff]
                  %626 = vst [vmem:[%s590 + $0x88] sm:$0xff] %v625
                  %v627 = vld [vmem:[%s589 + $0x90] sm:$0xff]
                  %628 = vst [vmem:[%s590 + $0x90] sm:$0xff] %v627
                  %v629 = vld [vmem:[%s589 + $0x98] sm:$0xff]
                  %630 = vst [vmem:[%s590 + $0x98] sm:$0xff] %v629
                  %v631 = vld [vmem:[%s589 + $0xa0] sm:$0xff]
                  %632 = vst [vmem:[%s590 + $0xa0] sm:$0xff] %v631
                  %v633 = vld [vmem:[%s589 + $0xa8] sm:$0xff]
                  %634 = vst [vmem:[%s590 + $0xa8] sm:$0xff] %v633
                  %v635 = vld [vmem:[%s589 + $0xb0] sm:$0xff]
                  %636 = vst [vmem:[%s590 + $0xb0] sm:$0xff] %v635
                  %v637 = vld [vmem:[%s589 + $0xb8] sm:$0xff]
                  %638 = vst [vmem:[%s590 + $0xb8] sm:$0xff] %v637
                  %v639 = vld [vmem:[%s589 + $0xc0] sm:$0xff]
                  %640 = vst [vmem:[%s590 + $0xc0] sm:$0xff] %v639
                  %v641 = vld [vmem:[%s589 + $0xc8] sm:$0xff]
                  %642 = vst [vmem:[%s590 + $0xc8] sm:$0xff] %v641
                  %v643 = vld [vmem:[%s589 + $0xd0] sm:$0xff]
                  %644 = vst [vmem:[%s590 + $0xd0] sm:$0xff] %v643
                  %v645 = vld [vmem:[%s589 + $0xd8] sm:$0xff]
                  %646 = vst [vmem:[%s590 + $0xd8] sm:$0xff] %v645
                  %v647 = vld [vmem:[%s589 + $0xe0] sm:$0xff]
                  %648 = vst [vmem:[%s590 + $0xe0] sm:$0xff] %v647
                  %v649 = vld [vmem:[%s589 + $0xe8] sm:$0xff]
                  %650 = vst [vmem:[%s590 + $0xe8] sm:$0xff] %v649
                  %v651 = vld [vmem:[%s589 + $0xf0] sm:$0xff]
                  %652 = vst [vmem:[%s590 + $0xf0] sm:$0xff] %v651
                  %v653 = vld [vmem:[%s589 + $0xf8] sm:$0xff]
                  %654 = vst [vmem:[%s590 + $0xf8] sm:$0xff] %v653
                  %v655 = vld [vmem:[%s589 + $0x20] sm:$0xff]
                  %656 = vst [vmem:[%s590 + $0x18] sm:$0xff] %v655
                  %v657 = vld [vmem:[%s589 + $0x28] sm:$0xff]
                  %658 = vst [vmem:[%s590 + $0x20] sm:$0xff] %v657
                  %v659 = vld [vmem:[%s589 + $0x30] sm:$0xff]
                  %660 = vst [vmem:[%s590 + $0x28] sm:$0xff] %v659
                  %v661 = vld [vmem:[%s589 + $0x38] sm:$0xff]
                  %662 = vst [vmem:[%s590 + $0x30] sm:$0xff] %v661
                  %v663 = vld [vmem:[%s589 + $0x40] sm:$0xff]
                  %664 = vst [vmem:[%s590 + $0x38] sm:$0xff] %v663
                  %v665 = vld [vmem:[%s589 + $0x48] sm:$0xff]
                  %666 = vst [vmem:[%s590 + $0x40] sm:$0xff] %v665
                  %v667 = vld [vmem:[%s589 + $0x50] sm:$0xff]
                  %668 = vst [vmem:[%s590 + $0x48] sm:$0xff] %v667
                  %v669 = vld [vmem:[%s589 + $0x58] sm:$0xff]
                  %670 = vst [vmem:[%s590 + $0x50] sm:$0xff] %v669
                  %v671 = vld [vmem:[%s589 + $0x60] sm:$0xff]
                  %672 = vst [vmem:[%s590 + $0x58] sm:$0xff] %v671
                  %v673 = vld [vmem:[%s589 + $0x68] sm:$0xff]
                  %674 = vst [vmem:[%s590 + $0x60] sm:$0xff] %v673
                  %v675 = vld [vmem:[%s589 + $0x70] sm:$0xff]
                  %676 = vst [vmem:[%s590 + $0x68] sm:$0xff] %v675
                  %v677 = vld [vmem:[%s589 + $0x78] sm:$0xff]
                  %678 = vst [vmem:[%s590 + $0x70] sm:$0xff] %v677
                  %v679 = vld [vmem:[%s589 + $0x80] sm:$0xff]
                  %680 = vst [vmem:[%s590 + $0x78] sm:$0xff] %v679
                  %v681 = vld [vmem:[%s589 + $0x88] sm:$0xff]
                  %682 = vst [vmem:[%s590 + $0x80] sm:$0xff] %v681
                  %v683 = vld [vmem:[%s589 + $0x90] sm:$0xff]
                  %684 = vst [vmem:[%s590 + $0x88] sm:$0xff] %v683
                  %v685 = vld [vmem:[%s589 + $0x98] sm:$0xff]
                  %686 = vst [vmem:[%s590 + $0x90] sm:$0xff] %v685
                  %v687 = vld [vmem:[%s589 + $0xa0] sm:$0xff]
                  %688 = vst [vmem:[%s590 + $0x98] sm:$0xff] %v687
                  %v689 = vld [vmem:[%s589 + $0xa8] sm:$0xff]
                  %690 = vst [vmem:[%s590 + $0xa0] sm:$0xff] %v689
                  %v691 = vld [vmem:[%s589 + $0xb0] sm:$0xff]
                  %692 = vst [vmem:[%s590 + $0xa8] sm:$0xff] %v691
                  %v693 = vld [vmem:[%s589 + $0xb8] sm:$0xff]
                  %694 = vst [vmem:[%s590 + $0xb0] sm:$0xff] %v693
                  %v695 = vld [vmem:[%s589 + $0xc0] sm:$0xff]
                  %696 = vst [vmem:[%s590 + $0xb8] sm:$0xff] %v695
                  %v697 = vld [vmem:[%s589 + $0xc8] sm:$0xff]
                  %698 = vst [vmem:[%s590 + $0xc0] sm:$0xff] %v697
                  %v699 = vld [vmem:[%s589 + $0xd0] sm:$0xff]
                  %700 = vst [vmem:[%s590 + $0xc8] sm:$0xff] %v699
                  %v701 = vld [vmem:[%s589 + $0xd8] sm:$0xff]
                  %702 = vst [vmem:[%s590 + $0xd0] sm:$0xff] %v701
                  %v703 = vld [vmem:[%s589 + $0xe0] sm:$0xff]
                  %704 = vst [vmem:[%s590 + $0xd8] sm:$0xff] %v703
                  %v705 = vld [vmem:[%s589 + $0xe8] sm:$0xff]
                  %706 = vst [vmem:[%s590 + $0xe0] sm:$0xff] %v705
                  %v707 = vld [vmem:[%s589 + $0xf0] sm:$0xff]
                  %708 = vst [vmem:[%s590 + $0xe8] sm:$0xff] %v707
                  %v709 = vld [vmem:[%s589 + $0xf8] sm:$0xff]
                  %710 = vst [vmem:[%s590 + $0xf0] sm:$0xff] %v709
                  %v711 = vld [vmem:[%s589 + $0x100] sm:$0xff]
                  %712 = vst [vmem:[%s590 + $0xf8] sm:$0xff] %v711
                  %v713 = vld [vmem:[%s589 + $0x108] sm:$0xff]
                  %714 = vst [vmem:[%s590 + $0x100] sm:$0xff] %v713
                  %v715 = vld [vmem:[%s589 + $0x110] sm:$0xff]
                  %716 = vst [vmem:[%s590 + $0x108] sm:$0xff] %v715
                  %v717 = vld [vmem:[%s589 + $0x118] sm:$0xff]
                  %718 = vst [vmem:[%s590 + $0x110] sm:$0xff] %v717
                  %s719 = sadd.s32 1, %s588
                  %p720 = scmp.ge.s32.totalorder %s719, %s579
                  %s721 = scalar_select %p720, 0, %s719
                  %s722 = smul.u32 %s721, 256
                  %s723 = smul.u32 %s721, 256
                  %s724 = scalar_lea.vmem %s360, %s722
                  %s725 = scalar_lea.vmem %s350, %s723 [#allocation4]
                $region86: #{conv_lstm_cell.1} parent=80 // loop_footer
                  %s585 = sadd.s32 %s583, 1
                $region87: #{conv_lstm_cell.1} parent=80 // loop_footer_branch
                  %582 = sbr.rel target = $region83
                $region88: #{conv_lstm_cell.1} parent=80 // loop_exit
                  _
                %s726 = sshrl.u32 %s578, 5
                %s727 = sand.u32 %s578, 31
                %s728 = smul.u32 %s726, 32
                %s729 = smul.u32 128, %s728
                %s730 = sshra.s32 %s729, 4
                %s731 = scalar_lea.vmem %s360, %s730
                %s732 = smul.u32 128, %s728
                %s733 = sshra.s32 %s732, 4
                %s734 = scalar_lea.vmem %s350, %s733 [#allocation4]
                // While loop
                $region89: #{conv_lstm_cell.1} parent=80 // loop_pre_header
                  _
                $region90: #{conv_lstm_cell.1} parent=80 // loop_header
                  %s738 = sphi 0, %s740
                  %p739 = scmp.ge.s32.totalorder %s738, %s727
                  %s743 = sphi 0, %s752
                  %s744 = sphi %s731, %s755
                  %s745 = sphi %s734, %s756
                $region91: #{conv_lstm_cell.1} parent=80 // loop_header_branch
                  %742 = sbr.rel (%p739) target = $region95
                $region92: #{conv_lstm_cell.1} parent=80 // loop_body
                  %v746 = vld [vmem:[%s744] sm:$0xff]
                  %747 = vst [vmem:[%s745] sm:$0xff] %v746
                  %v748 = vld [vmem:[%s744 + $0x20] sm:$0xff]
                  %749 = vst [vmem:[%s745 + $0x18] sm:$0xff] %v748
                  %s750 = sadd.s32 1, %s743
                  %p751 = scmp.ge.s32.totalorder %s750, %s727
                  %s752 = scalar_select %p751, 0, %s750
                  %s753 = smul.u32 %s752, 8
                  %s754 = smul.u32 %s752, 8
                  %s755 = scalar_lea.vmem %s731, %s753
                  %s756 = scalar_lea.vmem %s734, %s754 [#allocation4]
                $region93: #{conv_lstm_cell.1} parent=80 // loop_footer
                  %s740 = sadd.s32 %s738, 1
                $region94: #{conv_lstm_cell.1} parent=80 // loop_footer_branch
                  %737 = sbr.rel target = $region90
                $region95: #{conv_lstm_cell.1} parent=80 // loop_exit
                  _
                %s757 = sshll.u32 1, %s573
                %s758 = ssub.s32 %s757, 1
                loop: start=0, step=1, limit=1
                $region96: #{conv_lstm_cell.1} parent=80 // loop_pre_header
                  _
                $region97: #{conv_lstm_cell.1} parent=80 // loop_header
                  %s760 = sphi 0, %s764
                  %p761 = scmp.ge.s32.totalorder %s760, 1
                  %s765 = sphi %s575, %s575
                  %s766 = sphi %s577, %s577
                $region98: #{conv_lstm_cell.1} parent=80 // loop_header_branch
                  %763 = sbr.rel (%p761) target = $region102
                $region99: #{conv_lstm_cell.1} parent=80 // loop_body
                  %v767 = vld [vmem:[%s765] sm:%s758]
                  %768 = vst [vmem:[%s766] sm:%s758] %v767
                  %v769 = vld [vmem:[%s765 + $0x20] sm:%s758]
                  %770 = vst [vmem:[%s766 + $0x18] sm:%s758] %v769
                $region100: #{conv_lstm_cell.1} parent=80 // loop_footer
                  %s764 = sadd.s32 1, %s760
                $region101: #{conv_lstm_cell.1} parent=80 // loop_footer_branch
                  %759 = sbr.rel target = $region97
                $region102: #{conv_lstm_cell.1} parent=80 // loop_exit
                  _
              $region81: #{conv_lstm_cell.1} parent=47 // pred_fallthru
                _
            $region48: #{conv_lstm_cell.1} parent=43 // pred_fallthru
              _
            // Predicated region
            $region49: #{conv_lstm_cell.1} parent=43 // pred_check
              %p369 = pneg %p365
            $region50: #{conv_lstm_cell.1} parent=43 // pred_check_branch
              %371 = sbr.rel (%p369) target = $region52
            $region51: #{conv_lstm_cell.1} parent=43 // pred_region
              %s372 = sshll.u32 1, %s361
              %s373 = ssub.s32 %s372, 1
              loop: start=0, step=1, limit=1
              $region53: #{conv_lstm_cell.1} parent=51 // loop_pre_header
                _
              $region54: #{conv_lstm_cell.1} parent=51 // loop_header
                %s375 = sphi 0, %s379
                %p376 = scmp.ge.s32.totalorder %s375, 1
                %s380 = sphi %s360, %s360
                %s381 = sphi %s350, %s350
              $region55: #{conv_lstm_cell.1} parent=51 // loop_header_branch
                %378 = sbr.rel (%p376) target = $region59
              $region56: #{conv_lstm_cell.1} parent=51 // loop_body
                %v382 = vld [vmem:[%s380] sm:%s373]
                %383 = vst [vmem:[%s381] sm:%s373] %v382
                %v384 = vld [vmem:[%s380 + $0x20] sm:%s373]
                %385 = vst [vmem:[%s381 + $0x18] sm:%s373] %v384
              $region57: #{conv_lstm_cell.1} parent=51 // loop_footer
                %s379 = sadd.s32 1, %s375
              $region58: #{conv_lstm_cell.1} parent=51 // loop_footer_branch
                %374 = sbr.rel target = $region54
              $region59: #{conv_lstm_cell.1} parent=51 // loop_exit
                _
            $region52: #{conv_lstm_cell.1} parent=43 // pred_fallthru
              _
          $region44: #{conv_lstm_cell.1} parent=39 // pred_fallthru
            _
          %771 = vnop
        $region40: #{conv_lstm_cell.1} parent=35 // pred_fallthru
          _
        // Predicated region
        $region103: #{conv_lstm_cell.1} parent=35 // pred_check
          %p772 = pneg %p82
        $region104: #{conv_lstm_cell.1} parent=35 // pred_check_branch
          %774 = sbr.rel (%p772) target = $region106
        $region105: #{conv_lstm_cell.1} parent=35 // pred_region
          %s775 = sand.u32 %s72, 1
          %s776 = sand.u32 %s72, 1
          %s777 = smul.addr %s776, 16
          %s778 = scalar_lea.vmem [#allocation5], %s777
          %s779 = sadd.s32 %s23, 1
          %s780 = smul.u32 %s779, 3
          %s781 = smul.addr %s24, 8
          %s782 = sadd.s32 %s780, %s781
          %s783 = smul.addr %s782, 8
          %s784 = scalar_lea.vmem %s1, %s783
          // Predicated region
          $region107: #{conv_lstm_cell.1} parent=105 // pred_check
            _
          $region108: #{conv_lstm_cell.1} parent=105 // pred_check_branch
            %786 = sbr.rel (0) target = $region110
          $region109: #{conv_lstm_cell.1} parent=105 // pred_region
            // Predicated region
            $region111: #{conv_lstm_cell.1} parent=109 // pred_check
              _
            $region112: #{conv_lstm_cell.1} parent=109 // pred_check_branch
              %788 = sbr.rel (0) target = $region114
            $region113: #{conv_lstm_cell.1} parent=109 // pred_region
              // Predicated region
              $region126: #{conv_lstm_cell.1} parent=113 // pred_check
                _
              $region127: #{conv_lstm_cell.1} parent=113 // pred_check_branch
                %806 = sbr.rel (0) target = $region129
              $region128: #{conv_lstm_cell.1} parent=113 // pred_region
                loop: start=0, step=1, limit=1
                $region130: #{conv_lstm_cell.1} parent=128 // loop_pre_header
                  _
                $region131: #{conv_lstm_cell.1} parent=128 // loop_header
                  %s808 = sphi 0, %s812
                  %p809 = scmp.ge.s32.totalorder %s808, 1
                  %s813 = sphi %s784, %s784
                  %s814 = sphi %s778, %s778
                $region132: #{conv_lstm_cell.1} parent=128 // loop_header_branch
                  %811 = sbr.rel (%p809) target = $region136
                $region133: #{conv_lstm_cell.1} parent=128 // loop_body
                  %v815 = vld [vmem:[%s813] sm:$0xff]
                  %816 = vst [vmem:[%s814] sm:$0xff] %v815
                  %v817 = vld [vmem:[%s813 + $0x20] sm:$0xff]
                  %818 = vst [vmem:[%s814 + $0x8] sm:$0xff] %v817
                $region134: #{conv_lstm_cell.1} parent=128 // loop_footer
                  %s812 = sadd.s32 1, %s808
                $region135: #{conv_lstm_cell.1} parent=128 // loop_footer_branch
                  %807 = sbr.rel target = $region131
                $region136: #{conv_lstm_cell.1} parent=128 // loop_exit
                  _
              $region129: #{conv_lstm_cell.1} parent=113 // pred_fallthru
                _
              // Predicated region
              $region137: #{conv_lstm_cell.1} parent=113 // pred_check
                _
              $region138: #{conv_lstm_cell.1} parent=113 // pred_check_branch
                %820 = sbr.rel target = $region140
              $region139: #{conv_lstm_cell.1} parent=113 // pred_region
                _
              $region140: #{conv_lstm_cell.1} parent=113 // pred_fallthru
                _
            $region114: #{conv_lstm_cell.1} parent=109 // pred_fallthru
              _
            // Predicated region
            $region115: #{conv_lstm_cell.1} parent=109 // pred_check
              _
            $region116: #{conv_lstm_cell.1} parent=109 // pred_check_branch
              %790 = sbr.rel target = $region118
            $region117: #{conv_lstm_cell.1} parent=109 // pred_region
              %s792 = ssub.s32 256, 1
              loop: start=0, step=1, limit=1
              $region119: #{conv_lstm_cell.1} parent=117 // loop_pre_header
                _
              $region120: #{conv_lstm_cell.1} parent=117 // loop_header
                %s794 = sphi 0, %s798
                %p795 = scmp.ge.s32.totalorder %s794, 1
                %s799 = sphi %s784, %s784
                %s800 = sphi %s778, %s778
              $region121: #{conv_lstm_cell.1} parent=117 // loop_header_branch
                %797 = sbr.rel (%p795) target = $region125
              $region122: #{conv_lstm_cell.1} parent=117 // loop_body
                %v801 = vld [vmem:[%s799] sm:%s792]
                %802 = vst [vmem:[%s800] sm:%s792] %v801
                %v803 = vld [vmem:[%s799 + $0x20] sm:%s792]
                %804 = vst [vmem:[%s800 + $0x8] sm:%s792] %v803
              $region123: #{conv_lstm_cell.1} parent=117 // loop_footer
                %s798 = sadd.s32 1, %s794
              $region124: #{conv_lstm_cell.1} parent=117 // loop_footer_branch
                %793 = sbr.rel target = $region120
              $region125: #{conv_lstm_cell.1} parent=117 // loop_exit
                _
            $region118: #{conv_lstm_cell.1} parent=109 // pred_fallthru
              _
          $region110: #{conv_lstm_cell.1} parent=105 // pred_fallthru
            _
          %821 = vnop
        $region106: #{conv_lstm_cell.1} parent=35 // pred_fallthru
          _
        // Predicated region
        $region141: #{conv_lstm_cell.1} parent=35 // pred_check
          %p822 = pneg %p230
        $region142: #{conv_lstm_cell.1} parent=35 // pred_check_branch
          %824 = sbr.rel (%p822) target = $region144
        $region143: #{conv_lstm_cell.1} parent=35 // pred_region
          %s825 = smul.u32 3, %s23
          %p826 = scmp.lt.s32.totalorder %s24, 1
          %s827 = scalar_select %p826, %s24, 1
          %p828 = scmp.lt.s32.totalorder %s825, 2
          %s829 = scalar_select %p828, %s825, 2
          %s830 = smul.addr %s827, 3
          %s831 = sadd.s32 %s829, %s830
          %s832 = smul.addr %s831, 8
          %s833 = scalar_lea.vmem %s7, %s832
          %s834 = smul.u32 3, %s23
        $region144: #{conv_lstm_cell.1} parent=35 // pred_fallthru
          _
      $region36: #{conv_lstm_cell.1} parent=5 // pred_fallthru
        _
      %p835 = scmp.le.s32.totalorder 1, %s16
      %p836 = scmp.lt.s32.totalorder %s16, 3
      %p837 = pnand %p835, %p836
      %p838 = pneg %p837
      // Predicated region
      $region145: #{conv_lstm_cell.1} parent=5 // pred_check
        _
      $region146: #{conv_lstm_cell.1} parent=5 // pred_check_branch
        %840 = sbr.rel (%p837) target = $region148
      $region147: #{conv_lstm_cell.1} parent=5 // pred_region
        %s841 = ssub.s32 %s16, 1
        %s842 = sand.u32 %s43, 1
        %s843 = sand.u32 %s43, 1
        %s844 = smul.addr %s843, 48
        %s845 = scalar_lea.vmem [#allocation4], %s844
        // Predicated region
        $region149: #{conv_lstm_cell.1} parent=147 // pred_check
          %p846 = pneg %p56
        $region150: #{conv_lstm_cell.1} parent=147 // pred_check_branch
          %848 = sbr.rel (%p846) target = $region152
        $region151: #{conv_lstm_cell.1} parent=147 // pred_region
          _
        $region152: #{conv_lstm_cell.1} parent=147 // pred_fallthru
          _
        %s849 = sand.u32 %s75, 1
        %s850 = sand.u32 %s75, 1
        %s851 = smul.addr %s850, 16
        %s852 = scalar_lea.vmem [#allocation5], %s851
        // Predicated region
        $region153: #{conv_lstm_cell.1} parent=147 // pred_check
          %p853 = pneg %p88
        $region154: #{conv_lstm_cell.1} parent=147 // pred_check_branch
          %855 = sbr.rel (%p853) target = $region156
        $region155: #{conv_lstm_cell.1} parent=147 // pred_region
          _
        $region156: #{conv_lstm_cell.1} parent=147 // pred_fallthru
          _
        %s856 = sand.u32 %s43, 1
        %s857 = sand.u32 %s43, 1
        %s858 = smul.addr %s857, 48
        %s859 = scalar_lea.vmem [#allocation4], %s858
        %p860 = pneg %p56
        %p861 = pneg %p53
        %s862 = sand.u32 %s75, 1
        %s863 = sand.u32 %s75, 1
        %s864 = smul.addr %s863, 16
        %s865 = scalar_lea.vmem [#allocation5], %s864
        %p866 = pneg %p88
        %p867 = pneg %p85
        %p868 = pneg %p109
        %p869 = pneg %p106
        %p870 = pneg %p130
        %p871 = pneg %p127
        %s872 = smul.u32 3, %s25
        %p873 = scmp.lt.s32.totalorder %s872, 2
        %s874 = scalar_select %p873, %s872, 2
        %s875 = smul.addr %s874, 8
        %s876 = scalar_lea.vmem %s4, %s875
        %p877 = pneg %p156
        %p878 = pneg %p153
        %s879 = smul.u32 3, %s25
        %p880 = scmp.lt.s32.totalorder %s879, 2
        %s881 = scalar_select %p880, %s879, 2
        %s882 = smul.addr %s881, 8
        %s883 = scalar_lea.vmem %s5, %s882
        %p884 = pneg %p182
        %p885 = pneg %p179
        %s886 = smul.u32 3, %s25
        %p887 = scmp.lt.s32.totalorder %s886, 2
        %s888 = scalar_select %p887, %s886, 2
        %s889 = smul.addr %s888, 8
        %s890 = scalar_lea.vmem %s6, %s889
        %p891 = pneg %p208
        %p892 = pneg %p205
        %s893 = smul.u32 3, %s25
        %p894 = scmp.lt.s32.totalorder %s26, 1
        %s895 = scalar_select %p894, %s26, 1
        %p896 = scmp.lt.s32.totalorder %s893, 2
        %s897 = scalar_select %p896, %s893, 2
        %s898 = smul.addr %s895, 3
        %s899 = sadd.s32 %s897, %s898
        %s900 = smul.addr %s899, 8
        %s901 = scalar_lea.vmem %s7, %s900
        %p902 = pneg %p236
        %p903 = pneg %p233
        %p904 = pneg %p264
        %p905 = pneg %p261
        %s906 = smul.u32 3, %s25
        %p907 = scmp.lt.s32.totalorder %s26, 1
        %s908 = scalar_select %p907, %s26, 1
        %p909 = scmp.lt.s32.totalorder %s906, 2
        %s910 = scalar_select %p909, %s906, 2
        %s911 = smul.addr %s908, 3
        %s912 = sadd.s32 %s910, %s911
        %s913 = smul.addr %s912, 8
        %s914 = scalar_lea.vmem %s8, %s913
        %p915 = pneg %p292
        %p916 = pneg %p289
        %s917 = smul.u32 3, %s25
        %p918 = scmp.lt.s32.totalorder %s26, 1
        %s919 = scalar_select %p918, %s26, 1
        %p920 = scmp.lt.s32.totalorder %s917, 2
        %s921 = scalar_select %p920, %s917, 2
        %s922 = smul.addr %s919, 3
        %s923 = sadd.s32 %s921, %s922
        %s924 = smul.addr %s923, 8
        %s925 = scalar_lea.vmem %s9, %s924
        %s926 = smul.u32 3, %s25
        %s927 = ssub.s32 4, %s926
        %p928 = scmp.lt.s32.totalorder %s927, 3
        %s929 = scalar_select %p928, %s927, 3
        %s930 = smul.u32 256, %s929
        %s931 = sadd.s32 %s25, 1
        %s932 = smul.u32 %s931, 3
        %s933 = smul.u32 3, %s25
        %p934 = scmp.lt.s32.totalorder %s933, 2
        %s935 = scalar_select %p934, %s933, 2
        %s936 = smul.addr %s935, 8
        %s937 = scalar_lea.vmem %s4, %s936
        %s938 = smul.u32 3, %s25
        %s939 = smul.u32 3, %s25
        %p940 = scmp.lt.s32.totalorder %s939, 2
        %s941 = scalar_select %p940, %s939, 2
        %s942 = smul.addr %s941, 8
        %s943 = scalar_lea.vmem %s5, %s942
        %s944 = smul.u32 3, %s25
        %s945 = smul.u32 3, %s25
        %p946 = scmp.lt.s32.totalorder %s945, 2
        %s947 = scalar_select %p946, %s945, 2
        %s948 = smul.addr %s947, 8
        %s949 = scalar_lea.vmem %s6, %s948
        %s950 = smul.u32 3, %s25
        %s951 = smul.u32 3, %s25
        %p952 = scmp.lt.s32.totalorder %s26, 1
        %s953 = scalar_select %p952, %s26, 1
        %p954 = scmp.lt.s32.totalorder %s951, 2
        %s955 = scalar_select %p954, %s951, 2
        %s956 = smul.addr %s953, 3
        %s957 = sadd.s32 %s955, %s956
        %s958 = smul.addr %s957, 8
        %s959 = scalar_lea.vmem %s7, %s958
        %s960 = smul.u32 3, %s25
        %s961 = smul.u32 3, %s25
        %p962 = scmp.lt.s32.totalorder %s26, 1
        %s963 = scalar_select %p962, %s26, 1
        %p964 = scmp.lt.s32.totalorder %s961, 2
        %s965 = scalar_select %p964, %s961, 2
        %s966 = smul.addr %s963, 3
        %s967 = sadd.s32 %s965, %s966
        %s968 = smul.addr %s967, 8
        %s969 = scalar_lea.vmem %s8, %s968
        %s970 = smul.u32 3, %s25
        %s971 = smul.u32 3, %s25
        %p972 = scmp.lt.s32.totalorder %s26, 1
        %s973 = scalar_select %p972, %s26, 1
        %p974 = scmp.lt.s32.totalorder %s971, 2
        %s975 = scalar_select %p974, %s971, 2
        %s976 = smul.addr %s973, 3
        %s977 = sadd.s32 %s975, %s976
        %s978 = smul.addr %s977, 8
        %s979 = scalar_lea.vmem %s9, %s978
        %s980 = smul.u32 3, %s25
        %v981 = vld [vmem:[%s845] sm:$0xff]
        %v982 = vld [vmem:[%s845 + $0x8] sm:$0xff]
        %v983 = vld [vmem:[%s845 + $0x10] sm:$0xff]
        %v984 = vld [vmem:[%s845 + $0x18] sm:$0xff]
        %v985 = vld [vmem:[%s845 + $0x20] sm:$0xff]
        %v986 = vld [vmem:[%s845 + $0x28] sm:$0xff]
        %987 = vst [vmem:[#allocation2] sm:$0xff] %v981
        %988 = vst [vmem:[#allocation2 + $0x8] sm:$0xff] %v982
        %989 = vst [vmem:[#allocation2 + $0x10] sm:$0xff] %v983
        %990 = vst [vmem:[#allocation2 + $0x20] sm:$0xff] %v984
        %991 = vst [vmem:[#allocation2 + $0x28] sm:$0xff] %v985
        %992 = vst [vmem:[#allocation2 + $0x30] sm:$0xff] %v986
        %v993 = vld [vmem:[%s852] sm:$0xff]
        %v994 = vld [vmem:[%s852 + $0x8] sm:$0xff]
        %995 = vst [vmem:[#allocation2 + $0x18] sm:$0xff] %v993
        %996 = vst [vmem:[#allocation2 + $0x38] sm:$0xff] %v994
        %v997 = vld [vmem:[#allocation2] sm:$0xff]
        %v998 = vld [vmem:[#allocation2 + $0x8] sm:$0xff]
        %v999 = vld [vmem:[#allocation2 + $0x10] sm:$0xff]
        %v1000 = vld [vmem:[#allocation2 + $0x20] sm:$0xff]
        %v1001 = vld [vmem:[#allocation2 + $0x28] sm:$0xff]
        %v1002 = vld [vmem:[#allocation2 + $0x30] sm:$0xff]
        %1003 = vst [vmem:[#allocation3] sm:$0xff] %v997
        %1004 = vst [vmem:[#allocation3 + $0x8] sm:$0xff] %v998
        %1005 = vst [vmem:[#allocation3 + $0x10] sm:$0xff] %v999
        %1006 = vst [vmem:[#allocation3 + $0x18] sm:$0xff] %v1000
        %1007 = vst [vmem:[#allocation3 + $0x20] sm:$0xff] %v1001
        %1008 = vst [vmem:[#allocation3 + $0x28] sm:$0xff] %v1002
        %v1009 = vld [vmem:[#allocation2] sm:$0xff]
        %v1010 = vld [vmem:[#allocation2 + $0x8] sm:$0xff]
        %v1011 = vld [vmem:[#allocation2 + $0x10] sm:$0xff]
        %v1012 = vld [vmem:[#allocation2 + $0x18] sm:$0xff]
        %v1013 = vld [vmem:[#allocation2 + $0x20] sm:$0xff]
        %v1014 = vld [vmem:[#allocation2 + $0x28] sm:$0xff]
        %v1015 = vld [vmem:[#allocation2 + $0x30] sm:$0xff]
        %v1016 = vld [vmem:[#allocation2 + $0x38] sm:$0xff]
        %1025 = vrot.lane.b32.xlu0 %v1009, 127
        %v1026 = vpop.permute.xlu0 %1025
        %1027 = vrot.lane.b32.xlu0 %v1010, 127
        %v1028 = vpop.permute.xlu0 %1027
        %1029 = vrot.lane.b32.xlu0 %v1011, 127
        %v1030 = vpop.permute.xlu0 %1029
        %1031 = vrot.lane.b32.xlu0 %v1012, 127
        %v1032 = vpop.permute.xlu0 %1031
        %1033 = vrot.lane.b32.xlu0 %v1013, 127
        %v1034 = vpop.permute.xlu0 %1033
        %1035 = vrot.lane.b32.xlu0 %v1014, 127
        %v1036 = vpop.permute.xlu0 %1035
        %1037 = vrot.lane.b32.xlu0 %v1015, 127
        %v1038 = vpop.permute.xlu0 %1037
        %1039 = vrot.lane.b32.xlu0 %v1016, 127
        %v1040 = vpop.permute.xlu0 %1039
        %vm1041 = vcmask 1039360
        %v1042 = vsel %vm1041, %v1026, %v1028
        %v1043 = vsel %vm1041, %v1028, %v1030
        %v1044 = vsel %vm1041, %v1030, %v1032
        %v1045 = vsel %vm1041, %v1034, %v1036
        %v1046 = vsel %vm1041, %v1036, %v1038
        %v1047 = vsel %vm1041, %v1038, %v1040
        %1054 = vst [vmem:[#allocation3 + $0x30] sm:$0xff] %v1042
        %1055 = vst [vmem:[#allocation3 + $0x38] sm:$0xff] %v1043
        %1056 = vst [vmem:[#allocation3 + $0x40] sm:$0xff] %v1044
        %1057 = vst [vmem:[#allocation3 + $0x48] sm:$0xff] %v1045
        %1058 = vst [vmem:[#allocation3 + $0x50] sm:$0xff] %v1046
        %1059 = vst [vmem:[#allocation3 + $0x58] sm:$0xff] %v1047
        %v1060 = vld [vmem:[#allocation2] sm:$0xff]
        %v1061 = vld [vmem:[#allocation2 + $0x8] sm:$0xff]
        %v1062 = vld [vmem:[#allocation2 + $0x10] sm:$0xff]
        %v1063 = vld [vmem:[#allocation2 + $0x18] sm:$0xff]
        %v1064 = vld [vmem:[#allocation2 + $0x20] sm:$0xff]
        %v1065 = vld [vmem:[#allocation2 + $0x28] sm:$0xff]
        %v1066 = vld [vmem:[#allocation2 + $0x30] sm:$0xff]
        %v1067 = vld [vmem:[#allocation2 + $0x38] sm:$0xff]
        %1076 = vrot.lane.b32.xlu0 %v1060, 126
        %v1077 = vpop.permute.xlu0 %1076
        %1078 = vrot.lane.b32.xlu0 %v1061, 126
        %v1079 = vpop.permute.xlu0 %1078
        %1080 = vrot.lane.b32.xlu0 %v1062, 126
        %v1081 = vpop.permute.xlu0 %1080
        %1082 = vrot.lane.b32.xlu0 %v1063, 126
        %v1083 = vpop.permute.xlu0 %1082
        %1084 = vrot.lane.b32.xlu0 %v1064, 126
        %v1085 = vpop.permute.xlu0 %1084
        %1086 = vrot.lane.b32.xlu0 %v1065, 126
        %v1087 = vpop.permute.xlu0 %1086
        %1088 = vrot.lane.b32.xlu0 %v1066, 126
        %v1089 = vpop.permute.xlu0 %1088
        %1090 = vrot.lane.b32.xlu0 %v1067, 126
        %v1091 = vpop.permute.xlu0 %1090
        %vm1092 = vcmask 1031168
        %v1093 = vsel %vm1092, %v1077, %v1079
        %v1094 = vsel %vm1092, %v1079, %v1081
        %v1095 = vsel %vm1092, %v1081, %v1083
        %v1096 = vsel %vm1092, %v1085, %v1087
        %v1097 = vsel %vm1092, %v1087, %v1089
        %v1098 = vsel %vm1092, %v1089, %v1091
        %1105 = vst [vmem:[#allocation3 + $0x60] sm:$0xff] %v1093
        %1106 = vst [vmem:[#allocation3 + $0x68] sm:$0xff] %v1094
        %1107 = vst [vmem:[#allocation3 + $0x70] sm:$0xff] %v1095
        %1108 = vst [vmem:[#allocation3 + $0x78] sm:$0xff] %v1096
        %1109 = vst [vmem:[#allocation3 + $0x80] sm:$0xff] %v1097
        %1110 = vst [vmem:[#allocation3 + $0x88] sm:$0xff] %v1098
        %v1111 = vld [vmem:[#allocation2] sm:$0xff]
        %v1112 = vld [vmem:[#allocation2 + $0x8] sm:$0xff]
        %v1113 = vld [vmem:[#allocation2 + $0x10] sm:$0xff]
        %v1114 = vld [vmem:[#allocation2 + $0x18] sm:$0xff]
        %v1115 = vld [vmem:[#allocation2 + $0x20] sm:$0xff]
        %v1116 = vld [vmem:[#allocation2 + $0x28] sm:$0xff]
        %v1117 = vld [vmem:[#allocation2 + $0x30] sm:$0xff]
        %v1118 = vld [vmem:[#allocation2 + $0x38] sm:$0xff]
        %1127 = vrot.lane.b32.xlu0 %v1111, 110
        %v1128 = vpop.permute.xlu0 %1127
        %1129 = vrot.lane.b32.xlu0 %v1112, 110
        %v1130 = vpop.permute.xlu0 %1129
        %1131 = vrot.lane.b32.xlu0 %v1113, 110
        %v1132 = vpop.permute.xlu0 %1131
        %1133 = vrot.lane.b32.xlu0 %v1114, 110
        %v1134 = vpop.permute.xlu0 %1133
        %1135 = vrot.lane.b32.xlu0 %v1115, 110
        %v1136 = vpop.permute.xlu0 %1135
        %1137 = vrot.lane.b32.xlu0 %v1116, 110
        %v1138 = vpop.permute.xlu0 %1137
        %1139 = vrot.lane.b32.xlu0 %v1117, 110
        %v1140 = vpop.permute.xlu0 %1139
        %1141 = vrot.lane.b32.xlu0 %v1118, 110
        %v1142 = vpop.permute.xlu0 %1141
        %vm1143 = vcmask 900096
        %v1144 = vsel %vm1143, %v1128, %v1130
        %v1145 = vsel %vm1143, %v1130, %v1132
        %v1146 = vsel %vm1143, %v1132, %v1134
        %v1147 = vsel %vm1143, %v1136, %v1138
        %v1148 = vsel %vm1143, %v1138, %v1140
        %v1149 = vsel %vm1143, %v1140, %v1142
        %1156 = vst [vmem:[#allocation3 + $0x90] sm:$0xff] %v1144
        %1157 = vst [vmem:[#allocation3 + $0x98] sm:$0xff] %v1145
        %1158 = vst [vmem:[#allocation3 + $0xa0] sm:$0xff] %v1146
        %1159 = vst [vmem:[#allocation3 + $0xa8] sm:$0xff] %v1147
        %1160 = vst [vmem:[#allocation3 + $0xb0] sm:$0xff] %v1148
        %1161 = vst [vmem:[#allocation3 + $0xb8] sm:$0xff] %v1149
        %v1162 = vld [vmem:[#allocation2] sm:$0xff]
        %v1163 = vld [vmem:[#allocation2 + $0x8] sm:$0xff]
        %v1164 = vld [vmem:[#allocation2 + $0x10] sm:$0xff]
        %v1165 = vld [vmem:[#allocation2 + $0x18] sm:$0xff]
        %v1166 = vld [vmem:[#allocation2 + $0x20] sm:$0xff]
        %v1167 = vld [vmem:[#allocation2 + $0x28] sm:$0xff]
        %v1168 = vld [vmem:[#allocation2 + $0x30] sm:$0xff]
        %v1169 = vld [vmem:[#allocation2 + $0x38] sm:$0xff]
        %1178 = vrot.lane.b32.xlu0 %v1162, 109
        %v1179 = vpop.permute.xlu0 %1178
        %1180 = vrot.lane.b32.xlu0 %v1163, 109
        %v1181 = vpop.permute.xlu0 %1180
        %1182 = vrot.lane.b32.xlu0 %v1164, 109
        %v1183 = vpop.permute.xlu0 %1182
        %1184 = vrot.lane.b32.xlu0 %v1165, 109
        %v1185 = vpop.permute.xlu0 %1184
        %1186 = vrot.lane.b32.xlu0 %v1166, 109
        %v1187 = vpop.permute.xlu0 %1186
        %1188 = vrot.lane.b32.xlu0 %v1167, 109
        %v1189 = vpop.permute.xlu0 %1188
        %1190 = vrot.lane.b32.xlu0 %v1168, 109
        %v1191 = vpop.permute.xlu0 %1190
        %1192 = vrot.lane.b32.xlu0 %v1169, 109
        %v1193 = vpop.permute.xlu0 %1192
        %vm1194 = vcmask 891904
        %v1195 = vsel %vm1194, %v1179, %v1181
        %v1196 = vsel %vm1194, %v1181, %v1183
        %v1197 = vsel %vm1194, %v1183, %v1185
        %v1198 = vsel %vm1194, %v1187, %v1189
        %v1199 = vsel %vm1194, %v1189, %v1191
        %v1200 = vsel %vm1194, %v1191, %v1193
        %1207 = vst [vmem:[#allocation3 + $0xc0] sm:$0xff] %v1195
        %1208 = vst [vmem:[#allocation3 + $0xc8] sm:$0xff] %v1196
        %1209 = vst [vmem:[#allocation3 + $0xd0] sm:$0xff] %v1197
        %1210 = vst [vmem:[#allocation3 + $0xd8] sm:$0xff] %v1198
        %1211 = vst [vmem:[#allocation3 + $0xe0] sm:$0xff] %v1199
        %1212 = vst [vmem:[#allocation3 + $0xe8] sm:$0xff] %v1200
        %v1213 = vld [vmem:[#allocation2] sm:$0xff]
        %v1214 = vld [vmem:[#allocation2 + $0x8] sm:$0xff]
        %v1215 = vld [vmem:[#allocation2 + $0x10] sm:$0xff]
        %v1216 = vld [vmem:[#allocation2 + $0x18] sm:$0xff]
        %v1217 = vld [vmem:[#allocation2 + $0x20] sm:$0xff]
        %v1218 = vld [vmem:[#allocation2 + $0x28] sm:$0xff]
        %v1219 = vld [vmem:[#allocation2 + $0x30] sm:$0xff]
        %v1220 = vld [vmem:[#allocation2 + $0x38] sm:$0xff]
        %1229 = vrot.lane.b32.xlu0 %v1213, 108
        %v1230 = vpop.permute.xlu0 %1229
        %1231 = vrot.lane.b32.xlu0 %v1214, 108
        %v1232 = vpop.permute.xlu0 %1231
        %1233 = vrot.lane.b32.xlu0 %v1215, 108
        %v1234 = vpop.permute.xlu0 %1233
        %1235 = vrot.lane.b32.xlu0 %v1216, 108
        %v1236 = vpop.permute.xlu0 %1235
        %1237 = vrot.lane.b32.xlu0 %v1217, 108
        %v1238 = vpop.permute.xlu0 %1237
        %1239 = vrot.lane.b32.xlu0 %v1218, 108
        %v1240 = vpop.permute.xlu0 %1239
        %1241 = vrot.lane.b32.xlu0 %v1219, 108
        %v1242 = vpop.permute.xlu0 %1241
        %1243 = vrot.lane.b32.xlu0 %v1220, 108
        %v1244 = vpop.permute.xlu0 %1243
        %vm1245 = vcmask 883712
        %v1246 = vsel %vm1245, %v1230, %v1232
        %v1247 = vsel %vm1245, %v1232, %v1234
        %v1248 = vsel %vm1245, %v1234, %v1236
        %v1249 = vsel %vm1245, %v1238, %v1240
        %v1250 = vsel %vm1245, %v1240, %v1242
        %v1251 = vsel %vm1245, %v1242, %v1244
        %1258 = vst [vmem:[#allocation3 + $0xf0] sm:$0xff] %v1246
        %1259 = vst [vmem:[#allocation3 + $0xf8] sm:$0xff] %v1247
        %1260 = vst [vmem:[#allocation3 + $0x100] sm:$0xff] %v1248
        %1261 = vst [vmem:[#allocation3 + $0x108] sm:$0xff] %v1249
        %1262 = vst [vmem:[#allocation3 + $0x110] sm:$0xff] %v1250
        %1263 = vst [vmem:[#allocation3 + $0x118] sm:$0xff] %v1251
        %v1264 = vld [vmem:[#allocation2] sm:$0xff]
        %v1265 = vld [vmem:[#allocation2 + $0x8] sm:$0xff]
        %v1266 = vld [vmem:[#allocation2 + $0x10] sm:$0xff]
        %v1267 = vld [vmem:[#allocation2 + $0x18] sm:$0xff]
        %v1268 = vld [vmem:[#allocation2 + $0x20] sm:$0xff]
        %v1269 = vld [vmem:[#allocation2 + $0x28] sm:$0xff]
        %v1270 = vld [vmem:[#allocation2 + $0x30] sm:$0xff]
        %v1271 = vld [vmem:[#allocation2 + $0x38] sm:$0xff]
        %1280 = vrot.lane.b32.xlu0 %v1264, 92
        %v1281 = vpop.permute.xlu0 %1280
        %1282 = vrot.lane.b32.xlu0 %v1265, 92
        %v1283 = vpop.permute.xlu0 %1282
        %1284 = vrot.lane.b32.xlu0 %v1266, 92
        %v1285 = vpop.permute.xlu0 %1284
        %1286 = vrot.lane.b32.xlu0 %v1267, 92
        %v1287 = vpop.permute.xlu0 %1286
        %1288 = vrot.lane.b32.xlu0 %v1268, 92
        %v1289 = vpop.permute.xlu0 %1288
        %1290 = vrot.lane.b32.xlu0 %v1269, 92
        %v1291 = vpop.permute.xlu0 %1290
        %1292 = vrot.lane.b32.xlu0 %v1270, 92
        %v1293 = vpop.permute.xlu0 %1292
        %1294 = vrot.lane.b32.xlu0 %v1271, 92
        %v1295 = vpop.permute.xlu0 %1294
        %vm1296 = vcmask 752640
        %v1297 = vsel %vm1296, %v1281, %v1283
        %v1298 = vsel %vm1296, %v1283, %v1285
        %v1299 = vsel %vm1296, %v1285, %v1287
        %v1300 = vsel %vm1296, %v1289, %v1291
        %v1301 = vsel %vm1296, %v1291, %v1293
        %v1302 = vsel %vm1296, %v1293, %v1295
        %1309 = vst [vmem:[#allocation3 + $0x120] sm:$0xff] %v1297
        %1310 = vst [vmem:[#allocation3 + $0x128] sm:$0xff] %v1298
        %1311 = vst [vmem:[#allocation3 + $0x130] sm:$0xff] %v1299
        %1312 = vst [vmem:[#allocation3 + $0x138] sm:$0xff] %v1300
        %1313 = vst [vmem:[#allocation3 + $0x140] sm:$0xff] %v1301
        %1314 = vst [vmem:[#allocation3 + $0x148] sm:$0xff] %v1302
        %v1315 = vld [vmem:[#allocation2] sm:$0xff]
        %v1316 = vld [vmem:[#allocation2 + $0x8] sm:$0xff]
        %v1317 = vld [vmem:[#allocation2 + $0x10] sm:$0xff]
        %v1318 = vld [vmem:[#allocation2 + $0x18] sm:$0xff]
        %v1319 = vld [vmem:[#allocation2 + $0x20] sm:$0xff]
        %v1320 = vld [vmem:[#allocation2 + $0x28] sm:$0xff]
        %v1321 = vld [vmem:[#allocation2 + $0x30] sm:$0xff]
        %v1322 = vld [vmem:[#allocation2 + $0x38] sm:$0xff]
        %1331 = vrot.lane.b32.xlu0 %v1315, 91
        %v1332 = vpop.permute.xlu0 %1331
        %1333 = vrot.lane.b32.xlu0 %v1316, 91
        %v1334 = vpop.permute.xlu0 %1333
        %1335 = vrot.lane.b32.xlu0 %v1317, 91
        %v1336 = vpop.permute.xlu0 %1335
        %1337 = vrot.lane.b32.xlu0 %v1318, 91
        %v1338 = vpop.permute.xlu0 %1337
        %1339 = vrot.lane.b32.xlu0 %v1319, 91
        %v1340 = vpop.permute.xlu0 %1339
        %1341 = vrot.lane.b32.xlu0 %v1320, 91
        %v1342 = vpop.permute.xlu0 %1341
        %1343 = vrot.lane.b32.xlu0 %v1321, 91
        %v1344 = vpop.permute.xlu0 %1343
        %1345 = vrot.lane.b32.xlu0 %v1322, 91
        %v1346 = vpop.permute.xlu0 %1345
        %vm1347 = vcmask 744448
        %v1348 = vsel %vm1347, %v1332, %v1334
        %v1349 = vsel %vm1347, %v1334, %v1336
        %v1350 = vsel %vm1347, %v1336, %v1338
        %v1351 = vsel %vm1347, %v1340, %v1342
        %v1352 = vsel %vm1347, %v1342, %v1344
        %v1353 = vsel %vm1347, %v1344, %v1346
        %1360 = vst [vmem:[#allocation3 + $0x150] sm:$0xff] %v1348
        %1361 = vst [vmem:[#allocation3 + $0x158] sm:$0xff] %v1349
        %1362 = vst [vmem:[#allocation3 + $0x160] sm:$0xff] %v1350
        %1363 = vst [vmem:[#allocation3 + $0x168] sm:$0xff] %v1351
        %1364 = vst [vmem:[#allocation3 + $0x170] sm:$0xff] %v1352
        %1365 = vst [vmem:[#allocation3 + $0x178] sm:$0xff] %v1353
        %v1366 = vld [vmem:[#allocation2] sm:$0xff]
        %v1367 = vld [vmem:[#allocation2 + $0x8] sm:$0xff]
        %v1368 = vld [vmem:[#allocation2 + $0x10] sm:$0xff]
        %v1369 = vld [vmem:[#allocation2 + $0x18] sm:$0xff]
        %v1370 = vld [vmem:[#allocation2 + $0x20] sm:$0xff]
        %v1371 = vld [vmem:[#allocation2 + $0x28] sm:$0xff]
        %v1372 = vld [vmem:[#allocation2 + $0x30] sm:$0xff]
        %v1373 = vld [vmem:[#allocation2 + $0x38] sm:$0xff]
        %1382 = vrot.lane.b32.xlu0 %v1366, 90
        %v1383 = vpop.permute.xlu0 %1382
        %1384 = vrot.lane.b32.xlu0 %v1367, 90
        %v1385 = vpop.permute.xlu0 %1384
        %1386 = vrot.lane.b32.xlu0 %v1368, 90
        %v1387 = vpop.permute.xlu0 %1386
        %1388 = vrot.lane.b32.xlu0 %v1369, 90
        %v1389 = vpop.permute.xlu0 %1388
        %1390 = vrot.lane.b32.xlu0 %v1370, 90
        %v1391 = vpop.permute.xlu0 %1390
        %1392 = vrot.lane.b32.xlu0 %v1371, 90
        %v1393 = vpop.permute.xlu0 %1392
        %1394 = vrot.lane.b32.xlu0 %v1372, 90
        %v1395 = vpop.permute.xlu0 %1394
        %1396 = vrot.lane.b32.xlu0 %v1373, 90
        %v1397 = vpop.permute.xlu0 %1396
        %vm1398 = vcmask 736256
        %v1399 = vsel %vm1398, %v1383, %v1385
        %v1400 = vsel %vm1398, %v1385, %v1387
        %v1401 = vsel %vm1398, %v1387, %v1389
        %v1402 = vsel %vm1398, %v1391, %v1393
        %v1403 = vsel %vm1398, %v1393, %v1395
        %v1404 = vsel %vm1398, %v1395, %v1397
        %1411 = vst [vmem:[#allocation3 + $0x180] sm:$0xff] %v1399
        %1412 = vst [vmem:[#allocation3 + $0x188] sm:$0xff] %v1400
        %1413 = vst [vmem:[#allocation3 + $0x190] sm:$0xff] %v1401
        %1414 = vst [vmem:[#allocation3 + $0x198] sm:$0xff] %v1402
        %1415 = vst [vmem:[#allocation3 + $0x1a0] sm:$0xff] %v1403
        %1416 = vst [vmem:[#allocation3 + $0x1a8] sm:$0xff] %v1404
        %v1417 = vld [vmem:[%s3] sm:$0xff]
        %v1418 = vld [vmem:[%s3 + $0x8] sm:$0xff]
        %v1419 = vld [vmem:[%s3 + $0x10] sm:$0xff]
        %v1420 = vld [vmem:[%s3 + $0x18] sm:$0xff]
        %v1421 = vld [vmem:[%s2] sm:$0xff]
        %v1422 = vld [vmem:[%s2 + $0x8] sm:$0xff]
        %v1423 = vld [vmem:[%s2 + $0x10] sm:$0xff]
        %v1424 = vld [vmem:[%s2 + $0x18] sm:$0xff]
        %v1425 = vld [vmem:[%s2 + $0x20] sm:$0xff]
        %v1426 = vld [vmem:[%s2 + $0x28] sm:$0xff]
        %v1427 = vld [vmem:[%s2 + $0x30] sm:$0xff]
        %v1428 = vld [vmem:[%s2 + $0x38] sm:$0xff]
        %v1429 = vld [vmem:[#allocation3] sm:$0xff]
        %v1430 = vld [vmem:[#allocation3 + $0x8] sm:$0xff]
        %v1431 = vld [vmem:[#allocation3 + $0x10] sm:$0xff]
        %v1432 = vld [vmem:[#allocation3 + $0x18] sm:$0xff]
        %v1433 = vld [vmem:[#allocation3 + $0x20] sm:$0xff]
        %v1434 = vld [vmem:[#allocation3 + $0x28] sm:$0xff]
        %v1435 = vld [vmem:[#allocation3 + $0x30] sm:$0xff]
        %v1436 = vld [vmem:[#allocation3 + $0x38] sm:$0xff]
        %v1437 = vld [vmem:[#allocation3 + $0x40] sm:$0xff]
        %v1438 = vld [vmem:[#allocation3 + $0x48] sm:$0xff]
        %v1439 = vld [vmem:[#allocation3 + $0x50] sm:$0xff]
        %v1440 = vld [vmem:[#allocation3 + $0x58] sm:$0xff]
        %v1441 = vld [vmem:[#allocation3 + $0x60] sm:$0xff]
        %v1442 = vld [vmem:[#allocation3 + $0x68] sm:$0xff]
        %v1443 = vld [vmem:[#allocation3 + $0x70] sm:$0xff]
        %v1444 = vld [vmem:[#allocation3 + $0x78] sm:$0xff]
        %v1445 = vld [vmem:[#allocation3 + $0x80] sm:$0xff]
        %v1446 = vld [vmem:[#allocation3 + $0x88] sm:$0xff]
        %v1447 = vld [vmem:[#allocation3 + $0x90] sm:$0xff]
        %v1448 = vld [vmem:[#allocation3 + $0x98] sm:$0xff]
        %v1449 = vld [vmem:[#allocation3 + $0xa0] sm:$0xff]
        %v1450 = vld [vmem:[#allocation3 + $0xa8] sm:$0xff]
        %v1451 = vld [vmem:[#allocation3 + $0xb0] sm:$0xff]
        %v1452 = vld [vmem:[#allocation3 + $0xb8] sm:$0xff]
        %v1453 = vld [vmem:[#allocation3 + $0xc0] sm:$0xff]
        %v1454 = vld [vmem:[#allocation3 + $0xc8] sm:$0xff]
        %v1455 = vld [vmem:[#allocation3 + $0xd0] sm:$0xff]
        %v1456 = vld [vmem:[#allocation3 + $0xd8] sm:$0xff]
        %v1457 = vld [vmem:[#allocation3 + $0xe0] sm:$0xff]
        %v1458 = vld [vmem:[#allocation3 + $0xe8] sm:$0xff]
        %v1459 = vld [vmem:[#allocation3 + $0xf0] sm:$0xff]
        %v1460 = vld [vmem:[#allocation3 + $0xf8] sm:$0xff]
        %v1461 = vld [vmem:[#allocation3 + $0x100] sm:$0xff]
        %v1462 = vld [vmem:[#allocation3 + $0x108] sm:$0xff]
        %v1463 = vld [vmem:[#allocation3 + $0x110] sm:$0xff]
        %v1464 = vld [vmem:[#allocation3 + $0x118] sm:$0xff]
        %v1465 = vld [vmem:[#allocation3 + $0x120] sm:$0xff]
        %v1466 = vld [vmem:[#allocation3 + $0x128] sm:$0xff]
        %v1467 = vld [vmem:[#allocation3 + $0x130] sm:$0xff]
        %v1468 = vld [vmem:[#allocation3 + $0x138] sm:$0xff]
        %v1469 = vld [vmem:[#allocation3 + $0x140] sm:$0xff]
        %v1470 = vld [vmem:[#allocation3 + $0x148] sm:$0xff]
        %v1471 = vld [vmem:[#allocation3 + $0x150] sm:$0xff]
        %v1472 = vld [vmem:[#allocation3 + $0x158] sm:$0xff]
        %v1473 = vld [vmem:[#allocation3 + $0x160] sm:$0xff]
        %v1474 = vld [vmem:[#allocation3 + $0x168] sm:$0xff]
        %v1475 = vld [vmem:[#allocation3 + $0x170] sm:$0xff]
        %v1476 = vld [vmem:[#allocation3 + $0x178] sm:$0xff]
        %v1477 = vld [vmem:[#allocation3 + $0x180] sm:$0xff]
        %v1478 = vld [vmem:[#allocation3 + $0x188] sm:$0xff]
        %v1479 = vld [vmem:[#allocation3 + $0x190] sm:$0xff]
        %v1480 = vld [vmem:[#allocation3 + $0x198] sm:$0xff]
        %v1481 = vld [vmem:[#allocation3 + $0x1a0] sm:$0xff]
        %v1482 = vld [vmem:[#allocation3 + $0x1a8] sm:$0xff]
        %1484 = vset.pattern.permute.xlu0 0
        %1485 = vperm.xlu0 %1484, %v1417
        %v1486 = vpop.permute.xlu0 %1485
        %1489 = vset.pattern.permute.xlu0 0
        %1490 = vperm.xlu0 %1489, %v1418
        %v1491 = vpop.permute.xlu0 %1490
        %1494 = vset.pattern.permute.xlu0 0
        %1495 = vperm.xlu0 %1494, %v1419
        %v1496 = vpop.permute.xlu0 %1495
        %1499 = vset.pattern.permute.xlu0 0
        %1500 = vperm.xlu0 %1499, %v1420
        %v1501 = vpop.permute.xlu0 %1500
        %vm1503 = vcmask 130048
        %v1505 = vsel %vm1503, %v1422, 0
        %v1508 = vsel %vm1503, %v1424, 0
        %v1511 = vsel %vm1503, %v1426, 0
        %v1514 = vsel %vm1503, %v1428, 0
        %1516 = vmatprep.subr.mxu0 %v1475
        %1517 = vmatpush1.msra.mxu0 %v1474
        %1518 = vmatprep.subr.mxu0 %v1472
        %1519 = vmatpush1.msra.mxu0 %v1471
        %1520 = vmatprep.subr.mxu0 %v1469
        %1521 = vmatpush1.msra.mxu0 %v1468
        %1522 = vmatprep.subr.mxu0 %v1466
        %1523 = vmatpush1.msra.mxu0 %v1465
        %1524 = vmatprep.subr.mxu0 %v1463
        %1525 = vmatpush1.msra.mxu0 %v1462
        %1526 = vmatprep.subr.mxu0 %v1460
        %1527 = vmatpush1.msra.mxu0 %v1459
        %1528 = vmatprep.subr.mxu0 %v1457
        %1529 = vmatpush1.msra.mxu0 %v1456
        %1530 = vmatprep.subr.mxu0 %v1454
        %1531 = vmatpush1.msra.mxu0 %v1453
        %1532 = vmatprep.subr.mxu0 %v1451
        %1533 = vmatpush1.msra.mxu0 %v1450
        %1534 = vmatprep.subr.mxu0 %v1448
        %1535 = vmatpush1.msra.mxu0 %v1447
        %1536 = vmatprep.subr.mxu0 %v1445
        %1537 = vmatpush1.msra.mxu0 %v1444
        %1538 = vmatprep.subr.mxu0 %v1442
        %1539 = vmatpush1.msra.mxu0 %v1441
        %1540 = vmatprep.subr.mxu0 %v1439
        %1541 = vmatpush1.msra.mxu0 %v1438
        %1542 = vmatprep.subr.mxu0 %v1436
        %1543 = vmatpush1.msra.mxu0 %v1435
        %1544 = vmatprep.subr.mxu0 %v1433
        %1545 = vmatpush1.msra.mxu0 %v1432
        %1546 = vmatprep.subr.mxu0 %v1430
        %1547 = vmatpush1.msra.mxu0 %v1429
        %1548 = vmatprep.subr.mxu0 0.0
        %1549 = vmatpush2.msra.mxu0 0.0
        %1550 = vmatprep.subr.mxu0 0.0
        %1551 = vmatpush2.msra.mxu0 0.0
        %1552 = vmatprep.subr.mxu0 0.0
        %1553 = vmatpush2.msra.mxu0 0.0
        %1554 = vmatprep.subr.mxu0 0.0
        %1555 = vmatpush2.msra.mxu0 0.0
        %1556 = vmatprep.subr.mxu0 0.0
        %1557 = vmatpush2.msra.mxu0 0.0
        %1558 = vmatprep.subr.mxu0 0.0
        %1559 = vmatpush2.msra.mxu0 0.0
        %1560 = vmatprep.subr.mxu0 0.0
        %1561 = vmatpush2.msra.mxu0 0.0
        %1562 = vmatprep.subr.mxu0 0.0
        %1563 = vmatpush2.msra.mxu0 0.0
        %1564 = vmatprep.subr.mxu0 0.0
        %1565 = vmatpush2.msra.mxu0 0.0
        %1566 = vmatprep.subr.mxu0 0.0
        %1567 = vmatpush2.msra.mxu0 0.0
        %1568 = vmatprep.subr.mxu0 0.0
        %1569 = vmatpush2.msra.mxu0 0.0
        %1570 = vmatprep.subr.mxu0 0.0
        %1571 = vmatpush2.msra.mxu0 0.0
        %1572 = vmatprep.subr.mxu0 0.0
        %1573 = vmatpush2.msra.mxu0 0.0
        %1574 = vmatprep.subr.mxu0 0.0
        %1575 = vmatpush2.msra.mxu0 0.0
        %1576 = vmatprep.subr.mxu0 %v1481
        %1577 = vmatpush2.msra.mxu0 %v1480
        %1578 = vmatprep.subr.mxu0 %v1478
        %1579 = vmatpush2.msra.mxu0 %v1477
        %1580 = vmatprep.mubr.f32.mxu0 %v1505
        %1581 = vmatmul.mubr.f32.gmra.mxu0 %v1421
        %v1582 = vpop.f32.mrf.mxu0
        %v1583 = vadd.f32 %v1486, %v1582
        %v1584 = vpop.f32.mrf.mxu0
        %v1585 = vadd.f32 %v1486, %v1584
        %1586 = vmatprep.mubr.f32.mxu0 %v1508
        %1587 = vmatmul.mubr.f32.gmra.mxu0 %v1423
        %v1588 = vpop.f32.mrf.mxu0
        %v1589 = vadd.f32 %v1491, %v1588
        %v1590 = vpop.f32.mrf.mxu0
        %v1591 = vadd.f32 %v1491, %v1590
        %1592 = vmatprep.mubr.f32.mxu0 %v1511
        %1593 = vmatmul.mubr.f32.gmra.mxu0 %v1425
        %v1594 = vpop.f32.mrf.mxu0
        %v1595 = vadd.f32 %v1496, %v1594
        %v1596 = vpop.f32.mrf.mxu0
        %v1597 = vadd.f32 %v1496, %v1596
        %1598 = vmatprep.mubr.f32.mxu0 %v1514
        %1599 = vmatmul.mubr.f32.gmra.mxu0 %v1427
        %v1600 = vpop.f32.mrf.mxu0
        %v1601 = vadd.f32 %v1501, %v1600
        %v1602 = vpop.f32.mrf.mxu0
        %v1603 = vadd.f32 %v1501, %v1602
        %1604 = vdwg.mxu0
        %1605 = vmatprep.subr.mxu0 0.0
        %1606 = vmatpush1.msra.mxu0 %v1476
        %1607 = vmatprep.subr.mxu0 0.0
        %1608 = vmatpush1.msra.mxu0 %v1473
        %1609 = vmatprep.subr.mxu0 0.0
        %1610 = vmatpush1.msra.mxu0 %v1470
        %1611 = vmatprep.subr.mxu0 0.0
        %1612 = vmatpush1.msra.mxu0 %v1467
        %1613 = vmatprep.subr.mxu0 0.0
        %1614 = vmatpush1.msra.mxu0 %v1464
        %1615 = vmatprep.subr.mxu0 0.0
        %1616 = vmatpush1.msra.mxu0 %v1461
        %1617 = vmatprep.subr.mxu0 0.0
        %1618 = vmatpush1.msra.mxu0 %v1458
        %1619 = vmatprep.subr.mxu0 0.0
        %1620 = vmatpush1.msra.mxu0 %v1455
        %1621 = vmatprep.subr.mxu0 0.0
        %1622 = vmatpush1.msra.mxu0 %v1452
        %1623 = vmatprep.subr.mxu0 0.0
        %1624 = vmatpush1.msra.mxu0 %v1449
        %1625 = vmatprep.subr.mxu0 0.0
        %1626 = vmatpush1.msra.mxu0 %v1446
        %1627 = vmatprep.subr.mxu0 0.0
        %1628 = vmatpush1.msra.mxu0 %v1443
        %1629 = vmatprep.subr.mxu0 0.0
        %1630 = vmatpush1.msra.mxu0 %v1440
        %1631 = vmatprep.subr.mxu0 0.0
        %1632 = vmatpush1.msra.mxu0 %v1437
        %1633 = vmatprep.subr.mxu0 0.0
        %1634 = vmatpush1.msra.mxu0 %v1434
        %1635 = vmatprep.subr.mxu0 0.0
        %1636 = vmatpush1.msra.mxu0 %v1431
        %1637 = vmatprep.subr.mxu0 0.0
        %1638 = vmatpush2.msra.mxu0 0.0
        %1639 = vmatprep.subr.mxu0 0.0
        %1640 = vmatpush2.msra.mxu0 0.0
        %1641 = vmatprep.subr.mxu0 0.0
        %1642 = vmatpush2.msra.mxu0 0.0
        %1643 = vmatprep.subr.mxu0 0.0
        %1644 = vmatpush2.msra.mxu0 0.0
        %1645 = vmatprep.subr.mxu0 0.0
        %1646 = vmatpush2.msra.mxu0 0.0
        %1647 = vmatprep.subr.mxu0 0.0
        %1648 = vmatpush2.msra.mxu0 0.0
        %1649 = vmatprep.subr.mxu0 0.0
        %1650 = vmatpush2.msra.mxu0 0.0
        %1651 = vmatprep.subr.mxu0 0.0
        %1652 = vmatpush2.msra.mxu0 0.0
        %1653 = vmatprep.subr.mxu0 0.0
        %1654 = vmatpush2.msra.mxu0 0.0
        %1655 = vmatprep.subr.mxu0 0.0
        %1656 = vmatpush2.msra.mxu0 0.0
        %1657 = vmatprep.subr.mxu0 0.0
        %1658 = vmatpush2.msra.mxu0 0.0
        %1659 = vmatprep.subr.mxu0 0.0
        %1660 = vmatpush2.msra.mxu0 0.0
        %1661 = vmatprep.subr.mxu0 0.0
        %1662 = vmatpush2.msra.mxu0 0.0
        %1663 = vmatprep.subr.mxu0 0.0
        %1664 = vmatpush2.msra.mxu0 0.0
        %1665 = vmatprep.subr.mxu0 0.0
        %1666 = vmatpush2.msra.mxu0 %v1482
        %1667 = vmatprep.subr.mxu0 0.0
        %1668 = vmatpush2.msra.mxu0 %v1479
        %1669 = vmatprep.mubr.f32.mxu0 %v1505
        %1670 = vmatmul.mubr.f32.gmra.mxu0 %v1421
        %v1671 = vpop.f32.mrf.mxu0
        %v1672 = vadd.f32 %v1486, %v1671
        %v1673 = vpop.f32.mrf.mxu0
        %1674 = vmatprep.mubr.f32.mxu0 %v1508
        %1675 = vmatmul.mubr.f32.gmra.mxu0 %v1423
        %v1676 = vpop.f32.mrf.mxu0
        %v1677 = vadd.f32 %v1491, %v1676
        %v1678 = vpop.f32.mrf.mxu0
        %1679 = vmatprep.mubr.f32.mxu0 %v1511
        %1680 = vmatmul.mubr.f32.gmra.mxu0 %v1425
        %v1681 = vpop.f32.mrf.mxu0
        %v1682 = vadd.f32 %v1496, %v1681
        %v1683 = vpop.f32.mrf.mxu0
        %1684 = vmatprep.mubr.f32.mxu0 %v1514
        %1685 = vmatmul.mubr.f32.gmra.mxu0 %v1427
        %v1686 = vpop.f32.mrf.mxu0
        %v1687 = vadd.f32 %v1501, %v1686
        %v1688 = vpop.f32.mrf.mxu0
        %1689 = vdwg.mxu0
        %v1690 = vld [vmem:[%s959] sm:$0xff]
        %v1691 = vld [vmem:[%s959 + $0x8] sm:$0xff]
        %v1692 = vld [vmem:[%s959 + $0x10] sm:$0xff]
        %v1693 = vld [vmem:[%s937] sm:$0xff]
        %v1694 = vld [vmem:[%s937 + $0x8] sm:$0xff]
        %v1695 = vld [vmem:[%s937 + $0x10] sm:$0xff]
        %v1696 = vmul.f32 %v1693, %v1690
        %v1697 = vmul.f32 %v1694, %v1691
        %v1698 = vmul.f32 %v1695, %v1692
        %v1699 = vadd.f32 %v1583, %v1696
        %v1700 = vadd.f32 %v1585, %v1697
        %v1701 = vadd.f32 %v1672, %v1698
        %v1702 = vmul.f32 %v1699, 0.5
        %v1703 = vmul.f32 %v1700, 0.5
        %v1704 = vmul.f32 %v1701, 0.5
        %v1705 = vtanh.pop %v1702
        %v1706 = vtanh.pop %v1703
        %v1707 = vtanh.pop %v1704
        %v1708 = vmul.f32 %v1705, 0.5
        %v1709 = vmul.f32 %v1706, 0.5
        %v1710 = vmul.f32 %v1707, 0.5
        %v1711 = vadd.f32 %v1708, 0.5
        %v1712 = vadd.f32 %v1709, 0.5
        %v1713 = vadd.f32 %v1710, 0.5
        %v1714 = vld [vmem:[%s943] sm:$0xff]
        %v1715 = vld [vmem:[%s943 + $0x8] sm:$0xff]
        %v1716 = vld [vmem:[%s943 + $0x10] sm:$0xff]
        %v1717 = vmul.f32 %v1714, %v1690
        %v1718 = vmul.f32 %v1715, %v1691
        %v1719 = vmul.f32 %v1716, %v1692
        %v1720 = vadd.f32 %v1589, %v1717
        %v1721 = vadd.f32 %v1591, %v1718
        %v1722 = vadd.f32 %v1677, %v1719
        %v1723 = vmul.f32 %v1720, 0.5
        %v1724 = vmul.f32 %v1721, 0.5
        %v1725 = vmul.f32 %v1722, 0.5
        %v1726 = vtanh.pop %v1723
        %v1727 = vtanh.pop %v1724
        %v1728 = vtanh.pop %v1725
        %v1729 = vmul.f32 %v1726, 0.5
        %v1730 = vmul.f32 %v1727, 0.5
        %v1731 = vmul.f32 %v1728, 0.5
        %v1732 = vadd.f32 %v1729, 0.5
        %v1733 = vadd.f32 %v1730, 0.5
        %v1734 = vadd.f32 %v1731, 0.5
        %v1735 = vmul.f32 %v1732, %v1690
        %v1736 = vmul.f32 %v1733, %v1691
        %v1737 = vmul.f32 %v1734, %v1692
        %v1738 = vtanh.pop %v1595
        %v1739 = vtanh.pop %v1597
        %v1740 = vtanh.pop %v1682
        %v1741 = vmul.f32 %v1711, %v1738
        %v1742 = vmul.f32 %v1712, %v1739
        %v1743 = vmul.f32 %v1713, %v1740
        %v1744 = vadd.f32 %v1735, %v1741
        %v1745 = vadd.f32 %v1736, %v1742
        %v1746 = vadd.f32 %v1737, %v1743
        %v1747 = vld [vmem:[%s949] sm:$0xff]
        %v1748 = vld [vmem:[%s949 + $0x8] sm:$0xff]
        %v1749 = vld [vmem:[%s949 + $0x10] sm:$0xff]
        %v1750 = vmul.f32 %v1747, %v1744
        %v1751 = vmul.f32 %v1748, %v1745
        %v1752 = vmul.f32 %v1749, %v1746
        %v1753 = vadd.f32 %v1601, %v1750
        %v1754 = vadd.f32 %v1603, %v1751
        %v1755 = vadd.f32 %v1687, %v1752
        %v1756 = vmul.f32 %v1753, 0.5
        %v1757 = vmul.f32 %v1754, 0.5
        %v1758 = vmul.f32 %v1755, 0.5
        %v1759 = vtanh.pop %v1756
        %v1760 = vtanh.pop %v1757
        %v1761 = vtanh.pop %v1758
        %v1762 = vmul.f32 %v1759, 0.5
        %v1763 = vmul.f32 %v1760, 0.5
        %v1764 = vmul.f32 %v1761, 0.5
        %v1765 = vadd.f32 %v1762, 0.5
        %v1766 = vadd.f32 %v1763, 0.5
        %v1767 = vadd.f32 %v1764, 0.5
        %v1768 = vtanh.pop %v1744
        %v1769 = vtanh.pop %v1745
        %v1770 = vtanh.pop %v1746
        %v1771 = vmul.f32 %v1765, %v1768
        %v1772 = vmul.f32 %v1766, %v1769
        %v1773 = vmul.f32 %v1767, %v1770
        %1774 = vst [vmem:[%s969] sm:$0xff] %v1771
        %1775 = vst [vmem:[%s969 + $0x8] sm:$0xff] %v1772
        %1776 = vst [vmem:[%s969 + $0x10] sm:$0xff] %v1773
        %1777 = vst [vmem:[%s979] sm:$0xff] %v1744
        %1778 = vst [vmem:[%s979 + $0x8] sm:$0xff] %v1745
        %1779 = vst [vmem:[%s979 + $0x10] sm:$0xff] %v1746
        %s1780 = smul.u32 3, %s25
        %p1781 = scmp.lt.s32.totalorder %s26, 1
        %s1782 = scalar_select %p1781, %s26, 1
        %p1783 = scmp.lt.s32.totalorder %s1780, 2
        %s1784 = scalar_select %p1783, %s1780, 2
        %s1785 = smul.addr %s1782, 3
        %s1786 = sadd.s32 %s1784, %s1785
        %s1787 = smul.addr %s1786, 8
        %s1788 = scalar_lea.vmem %s8, %s1787
        %s1789 = smul.u32 3, %s25
        %p1790 = scmp.lt.s32.totalorder %s26, 1
        %s1791 = scalar_select %p1790, %s26, 1
        %p1792 = scmp.lt.s32.totalorder %s1789, 2
        %s1793 = scalar_select %p1792, %s1789, 2
        %s1794 = smul.addr %s1791, 3
        %s1795 = sadd.s32 %s1793, %s1794
        %s1796 = smul.addr %s1795, 8
        %s1797 = scalar_lea.vmem %s9, %s1796
        // Predicated region
        $region157: #{conv_lstm_cell.1} parent=147 // pred_check
          %p1798 = pneg %p261
        $region158: #{conv_lstm_cell.1} parent=147 // pred_check_branch
          %1800 = sbr.rel (%p1798) target = $region160
        $region159: #{conv_lstm_cell.1} parent=147 // pred_region
          %s1801 = smul.u32 3, %s25
        $region160: #{conv_lstm_cell.1} parent=147 // pred_fallthru
          _
        // Predicated region
        $region161: #{conv_lstm_cell.1} parent=147 // pred_check
          %p1802 = pneg %p289
        $region162: #{conv_lstm_cell.1} parent=147 // pred_check_branch
          %1804 = sbr.rel (%p1802) target = $region164
        $region163: #{conv_lstm_cell.1} parent=147 // pred_region
          %s1805 = smul.u32 3, %s25
        $region164: #{conv_lstm_cell.1} parent=147 // pred_fallthru
          _
      $region148: #{conv_lstm_cell.1} parent=5 // pred_fallthru
        _
      %p1806 = scmp.le.s32.totalorder 2, %s16
      // Predicated region
      $region165: #{conv_lstm_cell.1} parent=5 // pred_check
        %p1807 = pneg %p1806
      $region166: #{conv_lstm_cell.1} parent=5 // pred_check_branch
        %1809 = sbr.rel (%p1807) target = $region168
      $region167: #{conv_lstm_cell.1} parent=5 // pred_region
        %s1810 = ssub.s32 %s16, 2
        // Predicated region
        $region169: #{conv_lstm_cell.1} parent=167 // pred_check
          %p1811 = pneg %p267
        $region170: #{conv_lstm_cell.1} parent=167 // pred_check_branch
          %1813 = sbr.rel (%p1811) target = $region172
        $region171: #{conv_lstm_cell.1} parent=167 // pred_region
          %s1814 = smul.u32 3, %s27
          %p1815 = scmp.lt.s32.totalorder %s28, 1
          %s1816 = scalar_select %p1815, %s28, 1
          %p1817 = scmp.lt.s32.totalorder %s1814, 2
          %s1818 = scalar_select %p1817, %s1814, 2
          %s1819 = smul.addr %s1816, 3
          %s1820 = sadd.s32 %s1818, %s1819
          %s1821 = smul.addr %s1820, 8
          %s1822 = scalar_lea.vmem %s8, %s1821
        $region172: #{conv_lstm_cell.1} parent=167 // pred_fallthru
          _
        // Predicated region
        $region173: #{conv_lstm_cell.1} parent=167 // pred_check
          %p1823 = pneg %p295
        $region174: #{conv_lstm_cell.1} parent=167 // pred_check_branch
          %1825 = sbr.rel (%p1823) target = $region176
        $region175: #{conv_lstm_cell.1} parent=167 // pred_region
          %s1826 = smul.u32 3, %s27
          %p1827 = scmp.lt.s32.totalorder %s28, 1
          %s1828 = scalar_select %p1827, %s28, 1
          %p1829 = scmp.lt.s32.totalorder %s1826, 2
          %s1830 = scalar_select %p1829, %s1826, 2
          %s1831 = smul.addr %s1828, 3
          %s1832 = sadd.s32 %s1830, %s1831
          %s1833 = smul.addr %s1832, 8
          %s1834 = scalar_lea.vmem %s9, %s1833
        $region176: #{conv_lstm_cell.1} parent=167 // pred_fallthru
          _
      $region168: #{conv_lstm_cell.1} parent=5 // pred_fallthru
        _
    $region6: #{conv_lstm_cell.1} parent=1 // loop_footer
      %s20 = sadd.s32 1, %s16
    $region7: #{conv_lstm_cell.1} parent=1 // loop_footer_branch
      %15 = sbr.rel target = $region3
    $region8: #{conv_lstm_cell.1} parent=1 // loop_exit
      _

</llo_original>
